<compile_context>
chip_gen: v7x
topology: tpu7x:2x2x1
jax: 0.10.0
libtpu: 0.0.40
codegen_flags: <defaults>
</compile_context>

<pallas_src>
import functools

import numpy as np
import jax
import jax.numpy as jnp
from jax.experimental import pallas as pl
from jax.experimental.pallas import tpu as pltpu


def _round_up(x, m):
    return (x + m - 1) // m * m


@functools.lru_cache(maxsize=None)
def _tpu_defaults():
    """(lane multiple for DFT padding, max batch tile) per TPU generation."""
    lane, tb_max = 256, 256            # v6e / v7x: 256x256 MXU
    try:
        kind = jax.devices()[0].device_kind.lower()
        if "v5 lite" in kind or "v5e" in kind or "v5litepod" in kind:
            lane, tb_max = 128, 128    # v5e: 128x128 MXU, 1 vst slot
    except Exception:
        pass
    return lane, tb_max


@functools.lru_cache(maxsize=None)
def _vmem_budget_cap():
    """Usable VMEM budget: physical capacity minus headroom for Mosaic scratch."""
    phys = 64 << 20                    # conservative fallback: v7x per-TC VMEM
    try:
        phys = int(pltpu.get_tpu_info().vmem_capacity_bytes)
    except Exception:
        pass
    # ~48 MiB on v7x (64 MiB physical), ~100 MiB on v5e/v6e (128 MiB physical)
    return min(phys - (16 << 20), 100 << 20)


# ----------------------------------------------------------------------------
# Pallas kernel: whole MCB forward for one batch tile (n_modalities == 2)
# ----------------------------------------------------------------------------
def mcb_kernel(x0_ref, x1_ref, c0_ref, c1_ref, fcs_ref, icat_ref, out_ref):
    # in-kernel bf16 cast (free VPU filler under MXU slack); f32 accumulation
    x0 = x0_ref[...].astype(jnp.bfloat16)
    x1 = x1_ref[...].astype(jnp.bfloat16)

    # count-sketch projections (dense MXU matmul)
    # TODO(synk): exploit the 1-nonzero-per-row sparsity of C (per-row column
    # index + sign via scalar prefetch -> gather-add) once D*Pp no longer fits
    # VMEM at production sizes; also tile Fcs/Icat over Kp with an f32
    # accumulator (P3 pattern) for P in the thousands.
    y0 = jnp.dot(x0, c0_ref[...], preferred_element_type=jnp.float32)
    y1 = jnp.dot(x1, c1_ref[...], preferred_element_type=jnp.float32)

    # forward rfft as matmuls against the packed [cos | sin] matrix:
    #   F = [Re(rfft y) | -Im(rfft y)]   (the Im sign cancels in the product)
    f0 = jnp.dot(y0.astype(jnp.bfloat16), fcs_ref[...],
                 preferred_element_type=jnp.float32)
    f1 = jnp.dot(y1.astype(jnp.bfloat16), fcs_ref[...],
                 preferred_element_type=jnp.float32)

    # component-wise real*real / imag*imag product, exactly as in the torch
    # reference (NOT a complex multiply).  Stays f32 on the VPU.
    z = f0 * f1

    # fused irfft (onesided, 1/P): [zr | zi] @ [[IA],[IB]]
    phi = jnp.dot(z.astype(jnp.bfloat16), icat_ref[...],
                  preferred_element_type=jnp.float32)
    out_ref[...] = phi.astype(out_ref.dtype)


# ----------------------------------------------------------------------------
# Parameter construction (host-side, cached)
# ----------------------------------------------------------------------------
def make_count_sketch(original_dim, projection_dim, rng):
    """Matches the torch __init__: one +-1 per row at a column drawn from
    [0, projection_dim - 1) (np.random.randint upper bound exclusive)."""
    C = np.zeros((original_dim, projection_dim), dtype=np.float32)
    for i in range(original_dim):
        col = rng.randint(0, projection_dim - 1)
        C[i, col] = 2.0 * rng.randint(0, 2) - 1.0
    return C


@functools.lru_cache(maxsize=None)
def packed_dft_matrices(P, lane):
    """Lane-padded, fused DFT matrices (built once per (P, lane)).

    Fcs  : (Pp, 2*Kp) = [cos | sin]   so  y @ Fcs = [Re(rfft y) | -Im(rfft y)]
    Icat : (2*Kp, Pp) = [[IA],[IB]]   so  [zr | zi] @ Icat = irfft(zr + i*zi)
    Padding entries are exact zeros -> math unchanged, tiles lane-dense.
    """
    K = P // 2 + 1
    Pp = _round_up(P, lane)
    Kp = _round_up(K, lane)

    n = np.arange(P)[:, None]                      # (P, 1)
    k = np.arange(K)[None, :]                      # (1, K)
    ang = 2.0 * np.pi * n * k / P                  # (P, K)
    w = np.full((K,), 2.0)
    w[0] = 1.0
    if P % 2 == 0:
        w[-1] = 1.0

    Fcs = np.zeros((Pp, 2 * Kp), dtype=np.float32)
    Fcs[:P, :K] = np.cos(ang)
    Fcs[:P, Kp:Kp + K] = np.sin(ang)

    Icat = np.zeros((2 * Kp, Pp), dtype=np.float32)
    Icat[:K, :P] = (w[:, None] * np.cos(ang.T)) / P          # IA
    Icat[Kp:Kp + K, :P] = (-w[:, None] * np.sin(ang.T)) / P  # IB

    return (jnp.asarray(Fcs, dtype=jnp.bfloat16),
            jnp.asarray(Icat, dtype=jnp.bfloat16), Pp, Kp)


def pad_count_sketch(C, Pp):
    D, P = C.shape
    Cp = np.zeros((D, Pp), dtype=np.float32)
    Cp[:, :P] = np.asarray(C, dtype=np.float32)
    return jnp.asarray(Cp, dtype=jnp.bfloat16)     # +-1 / 0 are exact in bf16


# ----------------------------------------------------------------------------
# Wrapper calling pallas_call (batch-tiled grid)
# ----------------------------------------------------------------------------
@functools.partial(jax.jit,
                   static_argnames=("P", "tb", "single_buffer_weights"))
def _mcb_pallas(x0, x1, c0p, c1p, fcs, icat, *, P, tb,
                single_buffer_weights=True):
    B, D = x0.shape
    Pp = c0p.shape[1]
    Kp2 = fcs.shape[1]                 # == 2 * Kp
    Bp = _round_up(B, tb)

    # pad the batch only when it is ragged; no dtype conversion here (the
    # bf16 cast happens inside the kernel).
    if Bp != B:
        x0 = jnp.pad(x0, ((0, Bp - B), (0, 0)))
        x1 = jnp.pad(x1, ((0, Bp - B), (0, 0)))

    grid = (Bp // tb,)
    row = lambda b: (b, 0)
    full = lambda b: (0, 0)

    def weight_spec(shape):
        if single_buffer_weights:
            # constant index_map across the grid -> single buffer is enough
            return pl.BlockSpec(shape, full, pipeline_mode=pl.Buffered(1))
        return pl.BlockSpec(shape, full)

    in_specs = [
        pl.BlockSpec((tb, D), row),        # x0 batch tile (f32)
        pl.BlockSpec((tb, D), row),        # x1 batch tile (f32)
        weight_spec((D, Pp)),              # C0 (resident across grid)
        weight_spec((D, Pp)),              # C1
        weight_spec((Pp, Kp2)),            # [cos | sin]
        weight_spec((Kp2, Pp)),            # [[IA],[IB]]
    ]
    out_specs = pl.BlockSpec((tb, Pp), row)

    # VMEM budget: bf16 weights (single- or double-buffered), double-buffered
    # f32 x/out blocks, plus the f32/bf16 intermediates the kernel materializes.
    w_bytes = 2 * (2 * D * Pp + Pp * Kp2 + Kp2 * Pp)
    if not single_buffer_weights:
        w_bytes *= 2
    io_bytes = 2 * (2 * tb * D * 4 + tb * Pp * 4)
    tmp_bytes = tb * (2 * D * 2                 # bf16 casts of x0/x1
                      + 2 * Pp * (4 + 2)        # y0,y1 f32 + bf16 recasts
                      + 3 * Kp2 * 4 + Kp2 * 2   # f0,f1,z f32 + z bf16
                      + Pp * 4)                 # phi f32
    block_bytes = w_bytes + io_bytes + tmp_bytes
    vmem_limit = int(min(max(2 * block_bytes, 32 << 20), _vmem_budget_cap()))

    flops = (2 * 2 * Bp * D * Pp               # count sketch (x2 modalities)
             + 2 * 2 * Bp * Pp * Kp2           # forward DFTs (x2 modalities)
             + 2 * Bp * Kp2 * Pp)              # inverse DFT
    bytes_accessed = (2 * Bp * D * 4                      # x0, x1 (f32)
                      + 2 * (2 * D * Pp + 2 * Pp * Kp2)   # bf16 weights
                      + Bp * Pp * 4)                      # output

    out = pl.pallas_call(
        mcb_kernel,
        out_shape=jax.ShapeDtypeStruct((Bp, Pp), jnp.float32),
        grid=grid,
        in_specs=in_specs,
        out_specs=out_specs,
        compiler_params=pltpu.CompilerParams(
            dimension_semantics=("parallel",),
            vmem_limit_bytes=vmem_limit),
        cost_estimate=pl.CostEstimate(flops=int(flops), transcendentals=0,
                                      bytes_accessed=int(bytes_accessed)),
    )(x0, x1, c0p, c1p, fcs, icat)

    return out[:B, :P]


def mcb_forward(x0, x1, c0p, c1p, fcs, icat, *, P, tb):
    try:
        return _mcb_pallas(x0, x1, c0p, c1p, fcs, icat, P=P, tb=tb,
                           single_buffer_weights=True)
    except Exception:
        # Fallback for JAX builds that reject pipeline_mode=pl.Buffered(1):
        # identical kernel, default (double-buffered) weight specs.
        return _mcb_pallas(x0, x1, c0p, c1p, fcs, icat, P=P, tb=tb,
                           single_buffer_weights=False)


def choose_batch_tile(B, tb_max):
    """Largest tile (<= tb_max, multiple of 16 for the bf16 sublane pack) that
    does not over-pad tiny batches; for B > tb_max the grid has >= 2 steps so
    the "parallel" axis shards across TensorCores."""
    return min(tb_max, _round_up(B, 16))


# ----------------------------------------------------------------------------
# Pure-JAX reference (f32, jnp.fft) for a correctness check
# ----------------------------------------------------------------------------
def mcb_reference(x0, x1, C0, C1):
    P = C0.shape[1]
    y0 = x0 @ C0
    y1 = x1 @ C1
    f0 = jnp.fft.rfft(y0, axis=-1)
    f1 = jnp.fft.rfft(y1, axis=-1)
    # component-wise product of (real, imag) pairs, as in the torch reference
    z = (f0.real * f1.real) + 1j * (f0.imag * f1.imag)
    return jnp.fft.irfft(z, n=P, axis=-1)


if __name__ == "__main__":
    B, D, P = 8, 32, 16    # batch, original_dim, projection_dim (n_modalities=2)

    # deterministic count-sketch parameters (module __init__)
    np_rng = np.random.RandomState(0)
    C0 = make_count_sketch(D, P, np_rng)
    C1 = make_count_sketch(D, P, np_rng)

    # deterministic example inputs
    key = jax.random.PRNGKey(0)
    k0, k1 = jax.random.split(key)
    x0 = jax.random.normal(k0, (B, D), dtype=jnp.float32)
    x1 = jax.random.normal(k1, (B, D), dtype=jnp.float32)

    # one-time, cached parameter packing (hoisted out of the forward path)
    lane, tb_max = _tpu_defaults()
    fcs, icat, Pp, Kp = packed_dft_matrices(P, lane)
    c0p = pad_count_sketch(C0, Pp)
    c1p = pad_count_sketch(C1, Pp)

    tb = choose_batch_tile(B, tb_max)
    phi = mcb_forward(x0, x1, c0p, c1p, fcs, icat, P=P, tb=tb)
    jax.block_until_ready(phi)
    assert phi.shape == (B, P)

    phi_ref = mcb_reference(x0, x1, jnp.asarray(C0), jnp.asarray(C1))
    err = float(jnp.max(jnp.abs(phi - phi_ref)))
    scale = float(jnp.max(jnp.abs(phi_ref)))
    # bf16 MXU operands (f32 accumulation) -> loose tolerance vs. the f32 FFT ref
    assert err <= 5e-2 * scale + 5e-2, (err, scale)

    print("KERNEL_OK")
</pallas_src>

<mosaic_0001>
module attributes {stable_mosaic.version = 11 : i64} {
  func.func @mcb_kernel(%arg0: i32, %arg1: memref<16x32xf32, #tpu.memory_space<vmem>>, %arg2: memref<16x32xf32, #tpu.memory_space<vmem>>, %arg3: memref<32x256xbf16, #tpu.memory_space<vmem>>, %arg4: memref<32x256xbf16, #tpu.memory_space<vmem>>, %arg5: memref<256x512xbf16, #tpu.memory_space<vmem>>, %arg6: memref<512x256xbf16, #tpu.memory_space<vmem>>, %arg7: memref<16x256xf32, #tpu.memory_space<vmem>>) attributes {dimension_semantics = [#tpu.dimension_semantics<parallel>], iteration_bounds = array<i64: 1>, scalar_prefetch = 0 : i64, scratch_operands = 0 : i64, tpu.core_type = #tpu.core_type<tc>, window_params = [{transform_indices = @transform_0, window_bounds = array<i64: 16, 32>}, {transform_indices = @transform_1, window_bounds = array<i64: 16, 32>}, {pipeline_mode = #tpu.pipeline_mode<synchronous>, transform_indices = @transform_2, window_bounds = array<i64: 32, 256>}, {pipeline_mode = #tpu.pipeline_mode<synchronous>, transform_indices = @transform_3, window_bounds = array<i64: 32, 256>}, {pipeline_mode = #tpu.pipeline_mode<synchronous>, transform_indices = @transform_4, window_bounds = array<i64: 256, 512>}, {pipeline_mode = #tpu.pipeline_mode<synchronous>, transform_indices = @transform_5, window_bounds = array<i64: 512, 256>}, {transform_indices = @transform_6, window_bounds = array<i64: 16, 256>}]} {
    %c0 = arith.constant 0 : index
    %c0_0 = arith.constant 0 : index
    %0 = vector.load %arg1[%c0, %c0_0] : memref<16x32xf32, #tpu.memory_space<vmem>>, vector<16x32xf32>
    %1 = arith.truncf %0 : vector<16x32xf32> to vector<16x32xbf16>
    %c0_1 = arith.constant 0 : index
    %c0_2 = arith.constant 0 : index
    %2 = vector.load %arg2[%c0_1, %c0_2] : memref<16x32xf32, #tpu.memory_space<vmem>>, vector<16x32xf32>
    %3 = arith.truncf %2 : vector<16x32xf32> to vector<16x32xbf16>
    %c0_3 = arith.constant 0 : index
    %c0_4 = arith.constant 0 : index
    %4 = vector.load %arg3[%c0_3, %c0_4] : memref<32x256xbf16, #tpu.memory_space<vmem>>, vector<32x256xbf16>
    %cst = arith.constant dense<0.000000e+00> : vector<16x256xf32>
    %5 = tpu.matmul %1, %4, %cst {dimension_numbers = #tpu.dot_dimension_numbers<[1], [0], [0], [1], [0, 0, 1, 1], [], []>} : vector<16x32xbf16>, vector<32x256xbf16>, vector<16x256xf32> -> vector<16x256xf32>
    %c0_5 = arith.constant 0 : index
    %c0_6 = arith.constant 0 : index
    %6 = vector.load %arg4[%c0_5, %c0_6] : memref<32x256xbf16, #tpu.memory_space<vmem>>, vector<32x256xbf16>
    %cst_7 = arith.constant dense<0.000000e+00> : vector<16x256xf32>
    %7 = tpu.matmul %3, %6, %cst_7 {dimension_numbers = #tpu.dot_dimension_numbers<[1], [0], [0], [1], [0, 0, 1, 1], [], []>} : vector<16x32xbf16>, vector<32x256xbf16>, vector<16x256xf32> -> vector<16x256xf32>
    %8 = arith.truncf %5 : vector<16x256xf32> to vector<16x256xbf16>
    %c0_8 = arith.constant 0 : index
    %c0_9 = arith.constant 0 : index
    %9 = vector.load %arg5[%c0_8, %c0_9] : memref<256x512xbf16, #tpu.memory_space<vmem>>, vector<256x512xbf16>
    %cst_10 = arith.constant dense<0.000000e+00> : vector<16x512xf32>
    %10 = tpu.matmul %8, %9, %cst_10 {dimension_numbers = #tpu.dot_dimension_numbers<[1], [0], [0], [1], [0, 0, 1, 1], [], []>} : vector<16x256xbf16>, vector<256x512xbf16>, vector<16x512xf32> -> vector<16x512xf32>
    %11 = arith.truncf %7 : vector<16x256xf32> to vector<16x256xbf16>
    %c0_11 = arith.constant 0 : index
    %c0_12 = arith.constant 0 : index
    %12 = vector.load %arg5[%c0_11, %c0_12] : memref<256x512xbf16, #tpu.memory_space<vmem>>, vector<256x512xbf16>
    %cst_13 = arith.constant dense<0.000000e+00> : vector<16x512xf32>
    %13 = tpu.matmul %11, %12, %cst_13 {dimension_numbers = #tpu.dot_dimension_numbers<[1], [0], [0], [1], [0, 0, 1, 1], [], []>} : vector<16x256xbf16>, vector<256x512xbf16>, vector<16x512xf32> -> vector<16x512xf32>
    %14 = arith.mulf %10, %13 : vector<16x512xf32>
    %15 = arith.truncf %14 : vector<16x512xf32> to vector<16x512xbf16>
    %c0_14 = arith.constant 0 : index
    %c0_15 = arith.constant 0 : index
    %16 = vector.load %arg6[%c0_14, %c0_15] : memref<512x256xbf16, #tpu.memory_space<vmem>>, vector<512x256xbf16>
    %cst_16 = arith.constant dense<0.000000e+00> : vector<16x256xf32>
    %17 = tpu.matmul %15, %16, %cst_16 {dimension_numbers = #tpu.dot_dimension_numbers<[1], [0], [0], [1], [0, 0, 1, 1], [], []>} : vector<16x512xbf16>, vector<512x256xbf16>, vector<16x256xf32> -> vector<16x256xf32>
    %c0_17 = arith.constant 0 : index
    %c0_18 = arith.constant 0 : index
    %18 = vector.load %arg7[%c0_17, %c0_18] : memref<16x256xf32, #tpu.memory_space<vmem>>, vector<16x256xf32>
    tpu.vector_store %arg7[%c0_17, %c0_18], %17 {strides = array<i32>} : memref<16x256xf32, #tpu.memory_space<vmem>>, vector<16x256xf32>,
    return
  }
  func.func @transform_0(%arg0: i32) -> (i32, i32) {
    %c0_i32 = arith.constant 0 : i32
    %c0_i32_0 = arith.constant 0 : i32
    return %arg0, %c0_i32 : i32, i32
  }
  func.func @transform_1(%arg0: i32) -> (i32, i32) {
    %c0_i32 = arith.constant 0 : i32
    %c0_i32_0 = arith.constant 0 : i32
    return %arg0, %c0_i32 : i32, i32
  }
  func.func @transform_2(%arg0: i32) -> (i32, i32) {
    %c0_i32 = arith.constant 0 : i32
    %c0_i32_0 = arith.constant 0 : i32
    %c0_i32_1 = arith.constant 0 : i32
    return %c0_i32, %c0_i32_0 : i32, i32
  }
  func.func @transform_3(%arg0: i32) -> (i32, i32) {
    %c0_i32 = arith.constant 0 : i32
    %c0_i32_0 = arith.constant 0 : i32
    %c0_i32_1 = arith.constant 0 : i32
    return %c0_i32, %c0_i32_0 : i32, i32
  }
  func.func @transform_4(%arg0: i32) -> (i32, i32) {
    %c0_i32 = arith.constant 0 : i32
    %c0_i32_0 = arith.constant 0 : i32
    %c0_i32_1 = arith.constant 0 : i32
    return %c0_i32, %c0_i32_0 : i32, i32
  }
  func.func @transform_5(%arg0: i32) -> (i32, i32) {
    %c0_i32 = arith.constant 0 : i32
    %c0_i32_0 = arith.constant 0 : i32
    %c0_i32_1 = arith.constant 0 : i32
    return %c0_i32, %c0_i32_0 : i32, i32
  }
  func.func @transform_6(%arg0: i32) -> (i32, i32) {
    %c0_i32 = arith.constant 0 : i32
    %c0_i32_0 = arith.constant 0 : i32
    return %arg0, %c0_i32 : i32, i32
  }
}

module attributes {stable_mosaic.version = 11 : i64} {
  func.func @mcb_kernel(%arg0: i32, %arg1: memref<16x32xf32, #tpu.memory_space<vmem>>, %arg2: memref<16x32xf32, #tpu.memory_space<vmem>>, %arg3: memref<32x256xbf16, #tpu.memory_space<vmem>>, %arg4: memref<32x256xbf16, #tpu.memory_space<vmem>>, %arg5: memref<256x512xbf16, #tpu.memory_space<vmem>>, %arg6: memref<512x256xbf16, #tpu.memory_space<vmem>>, %arg7: memref<16x256xf32, #tpu.memory_space<vmem>>) attributes {dimension_semantics = [#tpu.dimension_semantics<parallel>], iteration_bounds = array<i64: 1>, scalar_prefetch = 0 : i64, scratch_operands = 0 : i64, tpu.core_type = #tpu.core_type<tc>, window_params = [{transform_indices = @transform_0, window_bounds = array<i64: 16, 32>}, {transform_indices = @transform_1, window_bounds = array<i64: 16, 32>}, {pipeline_mode = #tpu.pipeline_mode<synchronous>, transform_indices = @transform_2, window_bounds = array<i64: 32, 256>}, {pipeline_mode = #tpu.pipeline_mode<synchronous>, transform_indices = @transform_3, window_bounds = array<i64: 32, 256>}, {pipeline_mode = #tpu.pipeline_mode<synchronous>, transform_indices = @transform_4, window_bounds = array<i64: 256, 512>}, {pipeline_mode = #tpu.pipeline_mode<synchronous>, transform_indices = @transform_5, window_bounds = array<i64: 512, 256>}, {transform_indices = @transform_6, window_bounds = array<i64: 16, 256>}]} {
    %c0 = arith.constant 0 : index
    %c0_0 = arith.constant 0 : index
    %0 = vector.load %arg1[%c0, %c0_0] : memref<16x32xf32, #tpu.memory_space<vmem>>, vector<16x32xf32>
    %1 = arith.truncf %0 : vector<16x32xf32> to vector<16x32xbf16>
    %c0_1 = arith.constant 0 : index
    %c0_2 = arith.constant 0 : index
    %2 = vector.load %arg2[%c0_1, %c0_2] : memref<16x32xf32, #tpu.memory_space<vmem>>, vector<16x32xf32>
    %3 = arith.truncf %2 : vector<16x32xf32> to vector<16x32xbf16>
    %c0_3 = arith.constant 0 : index
    %c0_4 = arith.constant 0 : index
    %4 = vector.load %arg3[%c0_3, %c0_4] : memref<32x256xbf16, #tpu.memory_space<vmem>>, vector<32x256xbf16>
    %cst = arith.constant dense<0.000000e+00> : vector<16x256xf32>
    %5 = tpu.matmul %1, %4, %cst {dimension_numbers = #tpu.dot_dimension_numbers<[1], [0], [0], [1], [0, 0, 1, 1], [], []>} : vector<16x32xbf16>, vector<32x256xbf16>, vector<16x256xf32> -> vector<16x256xf32>
    %c0_5 = arith.constant 0 : index
    %c0_6 = arith.constant 0 : index
    %6 = vector.load %arg4[%c0_5, %c0_6] : memref<32x256xbf16, #tpu.memory_space<vmem>>, vector<32x256xbf16>
    %cst_7 = arith.constant dense<0.000000e+00> : vector<16x256xf32>
    %7 = tpu.matmul %3, %6, %cst_7 {dimension_numbers = #tpu.dot_dimension_numbers<[1], [0], [0], [1], [0, 0, 1, 1], [], []>} : vector<16x32xbf16>, vector<32x256xbf16>, vector<16x256xf32> -> vector<16x256xf32>
    %8 = arith.truncf %5 : vector<16x256xf32> to vector<16x256xbf16>
    %c0_8 = arith.constant 0 : index
    %c0_9 = arith.constant 0 : index
    %9 = vector.load %arg5[%c0_8, %c0_9] : memref<256x512xbf16, #tpu.memory_space<vmem>>, vector<256x512xbf16>
    %cst_10 = arith.constant dense<0.000000e+00> : vector<16x512xf32>
    %10 = tpu.matmul %8, %9, %cst_10 {dimension_numbers = #tpu.dot_dimension_numbers<[1], [0], [0], [1], [0, 0, 1, 1], [], []>} : vector<16x256xbf16>, vector<256x512xbf16>, vector<16x512xf32> -> vector<16x512xf32>
    %11 = arith.truncf %7 : vector<16x256xf32> to vector<16x256xbf16>
    %c0_11 = arith.constant 0 : index
    %c0_12 = arith.constant 0 : index
    %12 = vector.load %arg5[%c0_11, %c0_12] : memref<256x512xbf16, #tpu.memory_space<vmem>>, vector<256x512xbf16>
    %cst_13 = arith.constant dense<0.000000e+00> : vector<16x512xf32>
    %13 = tpu.matmul %11, %12, %cst_13 {dimension_numbers = #tpu.dot_dimension_numbers<[1], [0], [0], [1], [0, 0, 1, 1], [], []>} : vector<16x256xbf16>, vector<256x512xbf16>, vector<16x512xf32> -> vector<16x512xf32>
    %14 = arith.mulf %10, %13 : vector<16x512xf32>
    %15 = arith.truncf %14 : vector<16x512xf32> to vector<16x512xbf16>
    %c0_14 = arith.constant 0 : index
    %c0_15 = arith.constant 0 : index
    %16 = vector.load %arg6[%c0_14, %c0_15] : memref<512x256xbf16, #tpu.memory_space<vmem>>, vector<512x256xbf16>
    %cst_16 = arith.constant dense<0.000000e+00> : vector<16x256xf32>
    %17 = tpu.matmul %15, %16, %cst_16 {dimension_numbers = #tpu.dot_dimension_numbers<[1], [0], [0], [1], [0, 0, 1, 1], [], []>} : vector<16x512xbf16>, vector<512x256xbf16>, vector<16x256xf32> -> vector<16x256xf32>
    %c0_17 = arith.constant 0 : index
    %c0_18 = arith.constant 0 : index
    %18 = vector.load %arg7[%c0_17, %c0_18] : memref<16x256xf32, #tpu.memory_space<vmem>>, vector<16x256xf32>
    tpu.vector_store %arg7[%c0_17, %c0_18], %17 {strides = array<i32>} : memref<16x256xf32, #tpu.memory_space<vmem>>, vector<16x256xf32>,
    return
  }
  func.func @transform_0(%arg0: i32) -> (i32, i32) {
    %c0_i32 = arith.constant 0 : i32
    %c0_i32_0 = arith.constant 0 : i32
    return %arg0, %c0_i32 : i32, i32
  }
  func.func @transform_1(%arg0: i32) -> (i32, i32) {
    %c0_i32 = arith.constant 0 : i32
    %c0_i32_0 = arith.constant 0 : i32
    return %arg0, %c0_i32 : i32, i32
  }
  func.func @transform_2(%arg0: i32) -> (i32, i32) {
    %c0_i32 = arith.constant 0 : i32
    %c0_i32_0 = arith.constant 0 : i32
    %c0_i32_1 = arith.constant 0 : i32
    return %c0_i32, %c0_i32_0 : i32, i32
  }
  func.func @transform_3(%arg0: i32) -> (i32, i32) {
    %c0_i32 = arith.constant 0 : i32
    %c0_i32_0 = arith.constant 0 : i32
    %c0_i32_1 = arith.constant 0 : i32
    return %c0_i32, %c0_i32_0 : i32, i32
  }
  func.func @transform_4(%arg0: i32) -> (i32, i32) {
    %c0_i32 = arith.constant 0 : i32
    %c0_i32_0 = arith.constant 0 : i32
    %c0_i32_1 = arith.constant 0 : i32
    return %c0_i32, %c0_i32_0 : i32, i32
  }
  func.func @transform_5(%arg0: i32) -> (i32, i32) {
    %c0_i32 = arith.constant 0 : i32
    %c0_i32_0 = arith.constant 0 : i32
    %c0_i32_1 = arith.constant 0 : i32
    return %c0_i32, %c0_i32_0 : i32, i32
  }
  func.func @transform_6(%arg0: i32) -> (i32, i32) {
    %c0_i32 = arith.constant 0 : i32
    %c0_i32_0 = arith.constant 0 : i32
    return %arg0, %c0_i32 : i32, i32
  }
}

</mosaic_0001>

<llo_original>
// kernel: _mcb_pallas.1
$region0: #{_mcb_pallas.1}
  #allocation0 [shape = 'u32[]', space=smem, size = 0x4, offset = 0x4, fixed_abs, tag = 'smem constant byte address 0x4 - core index']
  #allocation1 [shape = 'u32[144,128]{1,0:T(1,128)}', space=vmem, size = 0x12000, scoped, tag = 'internal scratch']
  %s0 = inlined_call_operand.vmem [shape: f32[16,32], index: 0, kind: input, shape index: {}]
  %s1 = inlined_call_operand.vmem [shape: f32[16,32], index: 1, kind: input, shape index: {}]
  %s2 = inlined_call_operand.vmem [shape: bf16[32,256], index: 2, kind: input, shape index: {}]
  %s3 = inlined_call_operand.hbm [shape: bf16[32,256], index: 3, kind: input, shape index: {}]
  %s4 = inlined_call_operand.hbm [shape: bf16[256,512], index: 4, kind: input, shape index: {}]
  %s5 = inlined_call_operand.hbm [shape: bf16[512,256], index: 5, kind: input, shape index: {}]
  %s6 = inlined_call_operand.vmem [shape: f32[16,256], index: 6, kind: output, shape index: {}]
  %s7 = sld [smem:[#allocation0]]
  $region46: #{_mcb_pallas.1} parent=0
    _
  %s9 = ssub.s32 1, %s7
  %s10 = scalar_select 0, %s9, %s7
  $region1: #{_mcb_pallas.1} parent=0
    #allocation2 [shape = 'u8[16384]{0}', space=vmem, size = 0x4000, scoped, tag = 'input window, operand 3, single buffered']
    #allocation3 [shape = 's32[1]{0}', space=sflag, size = 0x4, scoped, tag = 'scoped memory for _mcb_pallas.1']
    #allocation4 [shape = 'u8[262144]{0}', space=vmem, size = 0x40000, scoped, tag = 'input window, operand 4, single buffered']
    #allocation5 [shape = 's32[1]{0}', space=sflag, size = 0x4, scoped, tag = 'scoped memory for _mcb_pallas.1']
    #allocation6 [shape = 'u8[262144]{0}', space=vmem, size = 0x40000, scoped, tag = 'input window, operand 5, single buffered']
    %11 = vsyncpa [#allocation3], 0
    %12 = vsyncpa [#allocation5], 0
    // Predicated region
    $region2: #{_mcb_pallas.1} parent=1 // pred_check
      _
    $region3: #{_mcb_pallas.1} parent=1 // pred_check_branch
      %14 = sbr.rel (0) target = $region5
    $region4: #{_mcb_pallas.1} parent=1 // pred_region
      _
    $region5: #{_mcb_pallas.1} parent=1 // pred_fallthru
      _
    // Predicated region
    $region6: #{_mcb_pallas.1} parent=1 // pred_check
      _
    $region7: #{_mcb_pallas.1} parent=1 // pred_check_branch
      %16 = sbr.rel (0) target = $region9
    $region8: #{_mcb_pallas.1} parent=1 // pred_region
      _
    $region9: #{_mcb_pallas.1} parent=1 // pred_fallthru
      _
    // Predicated region
    $region10: #{_mcb_pallas.1} parent=1 // pred_check
      _
    $region11: #{_mcb_pallas.1} parent=1 // pred_check_branch
      %18 = sbr.rel (0) target = $region13
    $region12: #{_mcb_pallas.1} parent=1 // pred_region
      _
    $region13: #{_mcb_pallas.1} parent=1 // pred_fallthru
      _
    // Predicated region
    $region14: #{_mcb_pallas.1} parent=1 // pred_check
      _
    $region15: #{_mcb_pallas.1} parent=1 // pred_check_branch
      %20 = sbr.rel (0) target = $region17
    $region16: #{_mcb_pallas.1} parent=1 // pred_region
      %s22 = ssub.s32 512, 512
      %23 = vsyncadd [#allocation3], %s22
      %s24 = sshll.u32 [#allocation2], 4
      %s25 = int_to_ptr.vmem [resolvable:$true] %s24
      %30 = dma.hbm_to_vmem [thread:$0]  %s3, 512, %s25, [#allocation3], 128, 128, 8
    $region17: #{_mcb_pallas.1} parent=1 // pred_fallthru
      _
    // Predicated region
    $region18: #{_mcb_pallas.1} parent=1 // pred_check
      _
    $region19: #{_mcb_pallas.1} parent=1 // pred_check_branch
      %32 = sbr.rel (0) target = $region21
    $region20: #{_mcb_pallas.1} parent=1 // pred_region
      %s34 = ssub.s32 8192, 8192
      %35 = vsyncadd [#allocation5], %s34
      %s36 = sshll.u32 [#allocation4], 4
      %s37 = int_to_ptr.vmem [resolvable:$true] %s36
      %42 = dma.hbm_to_vmem [thread:$0]  %s4, 8192, %s37, [#allocation5], 256, 256, 16
    $region21: #{_mcb_pallas.1} parent=1 // pred_fallthru
      _
    // Predicated region
    $region22: #{_mcb_pallas.1} parent=1 // pred_check
      _
    $region23: #{_mcb_pallas.1} parent=1 // pred_check_branch
      %44 = sbr.rel (0) target = $region25
    $region24: #{_mcb_pallas.1} parent=1 // pred_region
      %s46 = ssub.s32 8192, 8192
      %47 = vsyncadd [#allocation5], %s46
      %s48 = sshll.u32 [#allocation6], 4
      %s49 = int_to_ptr.vmem [resolvable:$true] %s48
      %54 = dma.hbm_to_vmem [thread:$0]  %s5, 8192, %s49, [#allocation5], 128, 128, 8
    $region25: #{_mcb_pallas.1} parent=1 // pred_fallthru
      _
    // Predicated region
    $region26: #{_mcb_pallas.1} parent=1 // pred_check
      _
    $region27: #{_mcb_pallas.1} parent=1 // pred_check_branch
      %56 = sbr.rel (0) target = $region29
    $region28: #{_mcb_pallas.1} parent=1 // pred_region
      %57 = dma.done [#allocation3], 512
    $region29: #{_mcb_pallas.1} parent=1 // pred_fallthru
      _
    // Predicated region
    $region30: #{_mcb_pallas.1} parent=1 // pred_check
      _
    $region31: #{_mcb_pallas.1} parent=1 // pred_check_branch
      %59 = sbr.rel (0) target = $region33
    $region32: #{_mcb_pallas.1} parent=1 // pred_region
      %60 = dma.done [#allocation5], 8192
    $region33: #{_mcb_pallas.1} parent=1 // pred_fallthru
      _
    // Predicated region
    $region34: #{_mcb_pallas.1} parent=1 // pred_check
      _
    $region35: #{_mcb_pallas.1} parent=1 // pred_check_branch
      %62 = sbr.rel (0) target = $region37
    $region36: #{_mcb_pallas.1} parent=1 // pred_region
      %63 = dma.done [#allocation5], 8192
    $region37: #{_mcb_pallas.1} parent=1 // pred_fallthru
      _
    %v65 = vld [vmem:[%s0] sm:$0xff]
    %v66 = vld [vmem:[%s0 + $0x8] sm:$0xff]
    %v67 = vpack.c.bf16 %v66, %v65
    %v68 = vld [vmem:[%s1] sm:$0xff]
    %v69 = vld [vmem:[%s1 + $0x8] sm:$0xff]
    %v70 = vpack.c.bf16 %v69, %v68
    %v71 = vld [vmem:[%s2] sm:$0xff]
    %v72 = vld [vmem:[%s2 + $0x8] sm:$0xff]
    %v73 = vld [vmem:[%s2 + $0x10] sm:$0xff]
    %v74 = vld [vmem:[%s2 + $0x18] sm:$0xff]
    %v79 = vunpack.c.l.b16 %v71
    %v80 = vunpack.c.h.b16 %v71
    %v81 = vunpack.c.l.b16 %v72
    %v82 = vunpack.c.h.b16 %v72
    %v83 = vunpack.c.l.b16 %v73
    %v84 = vunpack.c.h.b16 %v73
    %v85 = vunpack.c.l.b16 %v74
    %v86 = vunpack.c.h.b16 %v74
    %v87 = vpack.c.b16 %v81, %v79
    %v88 = vpack.c.b16 %v82, %v80
    %v89 = vpack.c.b16 %v85, %v83
    %v90 = vpack.c.b16 %v86, %v84
    %vm95 = vcmask 261120
    %v97 = vsel %vm95, %v67, 0
    %99 = vmatprep.subr.bf16.mxu0 %v88
    %100 = vmatpush1.bf16.msra.mxu0 %v87
    %101 = vmatprep.subr.bf16.mxu0 %v90
    %102 = vmatpush1.bf16.msra.mxu0 %v89
    %103 = vmatprep.subr.bf16.mxu0 0
    %104 = vmatpush1.bf16.msra.mxu0 0
    %105 = vmatprep.subr.bf16.mxu0 0
    %106 = vmatpush1.bf16.msra.mxu0 0
    %107 = vmatprep.subr.bf16.mxu0 0
    %108 = vmatpush1.bf16.msra.mxu0 0
    %109 = vmatprep.subr.bf16.mxu0 0
    %110 = vmatpush1.bf16.msra.mxu0 0
    %111 = vmatprep.subr.bf16.mxu0 0
    %112 = vmatpush1.bf16.msra.mxu0 0
    %113 = vmatprep.subr.bf16.mxu0 0
    %114 = vmatpush1.bf16.msra.mxu0 0
    %115 = vmatprep.subr.bf16.mxu0 0
    %116 = vmatpush1.bf16.msra.mxu0 0
    %117 = vmatprep.subr.bf16.mxu0 0
    %118 = vmatpush1.bf16.msra.mxu0 0
    %119 = vmatprep.subr.bf16.mxu0 0
    %120 = vmatpush1.bf16.msra.mxu0 0
    %121 = vmatprep.subr.bf16.mxu0 0
    %122 = vmatpush1.bf16.msra.mxu0 0
    %123 = vmatprep.subr.bf16.mxu0 0
    %124 = vmatpush1.bf16.msra.mxu0 0
    %125 = vmatprep.subr.bf16.mxu0 0
    %126 = vmatpush1.bf16.msra.mxu0 0
    %127 = vmatprep.subr.bf16.mxu0 0
    %128 = vmatpush1.bf16.msra.mxu0 0
    %129 = vmatprep.subr.bf16.mxu0 0
    %130 = vmatpush1.bf16.msra.mxu0 0
    %131 = vmatprep.mubr.bf16.mxu0 0
    %132 = vmatmul.mubr.bf16.gmra.mrb[0].mxu0 %v97
    %v133 = vpop.f32.mrb[0].mxu0
    %v134 = vadd.f32 0.0, %v133
    %v135 = vpop.f32.mrb[0].mxu0
    %v136 = vadd.f32 0.0, %v135
    %v137 = vpop.f32.mrb[0].mxu0
    %v138 = vadd.f32 0.0, %v137
    %v139 = vpop.f32.mrb[0].mxu0
    %v140 = vadd.f32 0.0, %v139
    %141 = vdwg.mxu0
    %v142 = vld [vmem:[#allocation2] sm:$0xff]
    %v143 = vld [vmem:[#allocation2 + $0x8] sm:$0xff]
    %v144 = vld [vmem:[#allocation2 + $0x10] sm:$0xff]
    %v145 = vld [vmem:[#allocation2 + $0x18] sm:$0xff]
    %v150 = vunpack.c.l.b16 %v142
    %v151 = vunpack.c.h.b16 %v142
    %v152 = vunpack.c.l.b16 %v143
    %v153 = vunpack.c.h.b16 %v143
    %v154 = vunpack.c.l.b16 %v144
    %v155 = vunpack.c.h.b16 %v144
    %v156 = vunpack.c.l.b16 %v145
    %v157 = vunpack.c.h.b16 %v145
    %v158 = vpack.c.b16 %v152, %v150
    %v159 = vpack.c.b16 %v153, %v151
    %v160 = vpack.c.b16 %v156, %v154
    %v161 = vpack.c.b16 %v157, %v155
    %v167 = vsel %vm95, %v70, 0
    %169 = vmatprep.subr.bf16.mxu0 %v159
    %170 = vmatpush1.bf16.msra.mxu0 %v158
    %171 = vmatprep.subr.bf16.mxu0 %v161
    %172 = vmatpush1.bf16.msra.mxu0 %v160
    %173 = vmatprep.subr.bf16.mxu0 0
    %174 = vmatpush1.bf16.msra.mxu0 0
    %175 = vmatprep.subr.bf16.mxu0 0
    %176 = vmatpush1.bf16.msra.mxu0 0
    %177 = vmatprep.subr.bf16.mxu0 0
    %178 = vmatpush1.bf16.msra.mxu0 0
    %179 = vmatprep.subr.bf16.mxu0 0
    %180 = vmatpush1.bf16.msra.mxu0 0
    %181 = vmatprep.subr.bf16.mxu0 0
    %182 = vmatpush1.bf16.msra.mxu0 0
    %183 = vmatprep.subr.bf16.mxu0 0
    %184 = vmatpush1.bf16.msra.mxu0 0
    %185 = vmatprep.subr.bf16.mxu0 0
    %186 = vmatpush1.bf16.msra.mxu0 0
    %187 = vmatprep.subr.bf16.mxu0 0
    %188 = vmatpush1.bf16.msra.mxu0 0
    %189 = vmatprep.subr.bf16.mxu0 0
    %190 = vmatpush1.bf16.msra.mxu0 0
    %191 = vmatprep.subr.bf16.mxu0 0
    %192 = vmatpush1.bf16.msra.mxu0 0
    %193 = vmatprep.subr.bf16.mxu0 0
    %194 = vmatpush1.bf16.msra.mxu0 0
    %195 = vmatprep.subr.bf16.mxu0 0
    %196 = vmatpush1.bf16.msra.mxu0 0
    %197 = vmatprep.subr.bf16.mxu0 0
    %198 = vmatpush1.bf16.msra.mxu0 0
    %199 = vmatprep.subr.bf16.mxu0 0
    %200 = vmatpush1.bf16.msra.mxu0 0
    %201 = vmatprep.mubr.bf16.mxu0 0
    %202 = vmatmul.mubr.bf16.gmra.mrb[0].mxu0 %v167
    %v203 = vpop.f32.mrb[0].mxu0
    %v204 = vadd.f32 0.0, %v203
    %v205 = vpop.f32.mrb[0].mxu0
    %v206 = vadd.f32 0.0, %v205
    %v207 = vpop.f32.mrb[0].mxu0
    %v208 = vadd.f32 0.0, %v207
    %v209 = vpop.f32.mrb[0].mxu0
    %v210 = vadd.f32 0.0, %v209
    %211 = vdwg.mxu0
    %v212 = vpack.c.bf16 %v138, %v134
    %v213 = vpack.c.bf16 %v140, %v136
    %v214 = vld [vmem:[#allocation4] sm:$0xff]
    %v215 = vld [vmem:[#allocation4 + $0x8] sm:$0xff]
    %v216 = vld [vmem:[#allocation4 + $0x10] sm:$0xff]
    %v217 = vld [vmem:[#allocation4 + $0x18] sm:$0xff]
    %v218 = vld [vmem:[#allocation4 + $0x20] sm:$0xff]
    %v219 = vld [vmem:[#allocation4 + $0x28] sm:$0xff]
    %v220 = vld [vmem:[#allocation4 + $0x30] sm:$0xff]
    %v221 = vld [vmem:[#allocation4 + $0x38] sm:$0xff]
    %v222 = vld [vmem:[#allocation4 + $0x40] sm:$0xff]
    %v223 = vld [vmem:[#allocation4 + $0x48] sm:$0xff]
    %v224 = vld [vmem:[#allocation4 + $0x50] sm:$0xff]
    %v225 = vld [vmem:[#allocation4 + $0x58] sm:$0xff]
    %v226 = vld [vmem:[#allocation4 + $0x60] sm:$0xff]
    %v227 = vld [vmem:[#allocation4 + $0x68] sm:$0xff]
    %v228 = vld [vmem:[#allocation4 + $0x70] sm:$0xff]
    %v229 = vld [vmem:[#allocation4 + $0x78] sm:$0xff]
    %v230 = vld [vmem:[#allocation4 + $0x80] sm:$0xff]
    %v231 = vld [vmem:[#allocation4 + $0x88] sm:$0xff]
    %v232 = vld [vmem:[#allocation4 + $0x90] sm:$0xff]
    %v233 = vld [vmem:[#allocation4 + $0x98] sm:$0xff]
    %v234 = vld [vmem:[#allocation4 + $0xa0] sm:$0xff]
    %v235 = vld [vmem:[#allocation4 + $0xa8] sm:$0xff]
    %v236 = vld [vmem:[#allocation4 + $0xb0] sm:$0xff]
    %v237 = vld [vmem:[#allocation4 + $0xb8] sm:$0xff]
    %v238 = vld [vmem:[#allocation4 + $0xc0] sm:$0xff]
    %v239 = vld [vmem:[#allocation4 + $0xc8] sm:$0xff]
    %v240 = vld [vmem:[#allocation4 + $0xd0] sm:$0xff]
    %v241 = vld [vmem:[#allocation4 + $0xd8] sm:$0xff]
    %v242 = vld [vmem:[#allocation4 + $0xe0] sm:$0xff]
    %v243 = vld [vmem:[#allocation4 + $0xe8] sm:$0xff]
    %v244 = vld [vmem:[#allocation4 + $0xf0] sm:$0xff]
    %v245 = vld [vmem:[#allocation4 + $0xf8] sm:$0xff]
    %v246 = vld [vmem:[#allocation4 + $0x100] sm:$0xff]
    %v247 = vld [vmem:[#allocation4 + $0x108] sm:$0xff]
    %v248 = vld [vmem:[#allocation4 + $0x110] sm:$0xff]
    %v249 = vld [vmem:[#allocation4 + $0x118] sm:$0xff]
    %v250 = vld [vmem:[#allocation4 + $0x120] sm:$0xff]
    %v251 = vld [vmem:[#allocation4 + $0x128] sm:$0xff]
    %v252 = vld [vmem:[#allocation4 + $0x130] sm:$0xff]
    %v253 = vld [vmem:[#allocation4 + $0x138] sm:$0xff]
    %v254 = vld [vmem:[#allocation4 + $0x140] sm:$0xff]
    %v255 = vld [vmem:[#allocation4 + $0x148] sm:$0xff]
    %v256 = vld [vmem:[#allocation4 + $0x150] sm:$0xff]
    %v257 = vld [vmem:[#allocation4 + $0x158] sm:$0xff]
    %v258 = vld [vmem:[#allocation4 + $0x160] sm:$0xff]
    %v259 = vld [vmem:[#allocation4 + $0x168] sm:$0xff]
    %v260 = vld [vmem:[#allocation4 + $0x170] sm:$0xff]
    %v261 = vld [vmem:[#allocation4 + $0x178] sm:$0xff]
    %v262 = vld [vmem:[#allocation4 + $0x180] sm:$0xff]
    %v263 = vld [vmem:[#allocation4 + $0x188] sm:$0xff]
    %v264 = vld [vmem:[#allocation4 + $0x190] sm:$0xff]
    %v265 = vld [vmem:[#allocation4 + $0x198] sm:$0xff]
    %v266 = vld [vmem:[#allocation4 + $0x1a0] sm:$0xff]
    %v267 = vld [vmem:[#allocation4 + $0x1a8] sm:$0xff]
    %v268 = vld [vmem:[#allocation4 + $0x1b0] sm:$0xff]
    %v269 = vld [vmem:[#allocation4 + $0x1b8] sm:$0xff]
    %v270 = vld [vmem:[#allocation4 + $0x1c0] sm:$0xff]
    %v271 = vld [vmem:[#allocation4 + $0x1c8] sm:$0xff]
    %v272 = vld [vmem:[#allocation4 + $0x1d0] sm:$0xff]
    %v273 = vld [vmem:[#allocation4 + $0x1d8] sm:$0xff]
    %v274 = vld [vmem:[#allocation4 + $0x1e0] sm:$0xff]
    %v275 = vld [vmem:[#allocation4 + $0x1e8] sm:$0xff]
    %v276 = vld [vmem:[#allocation4 + $0x1f0] sm:$0xff]
    %v277 = vld [vmem:[#allocation4 + $0x1f8] sm:$0xff]
    %v342 = vunpack.c.l.b16 %v214
    %v343 = vunpack.c.h.b16 %v214
    %v344 = vunpack.c.l.b16 %v215
    %v345 = vunpack.c.h.b16 %v215
    %v346 = vunpack.c.l.b16 %v216
    %v347 = vunpack.c.h.b16 %v216
    %v348 = vunpack.c.l.b16 %v217
    %v349 = vunpack.c.h.b16 %v217
    %v350 = vunpack.c.l.b16 %v218
    %v351 = vunpack.c.h.b16 %v218
    %v352 = vunpack.c.l.b16 %v219
    %v353 = vunpack.c.h.b16 %v219
    %v354 = vunpack.c.l.b16 %v220
    %v355 = vunpack.c.h.b16 %v220
    %v356 = vunpack.c.l.b16 %v221
    %v357 = vunpack.c.h.b16 %v221
    %v358 = vunpack.c.l.b16 %v222
    %v359 = vunpack.c.h.b16 %v222
    %v360 = vunpack.c.l.b16 %v223
    %v361 = vunpack.c.h.b16 %v223
    %v362 = vunpack.c.l.b16 %v224
    %v363 = vunpack.c.h.b16 %v224
    %v364 = vunpack.c.l.b16 %v225
    %v365 = vunpack.c.h.b16 %v225
    %v366 = vunpack.c.l.b16 %v226
    %v367 = vunpack.c.h.b16 %v226
    %v368 = vunpack.c.l.b16 %v227
    %v369 = vunpack.c.h.b16 %v227
    %v370 = vunpack.c.l.b16 %v228
    %v371 = vunpack.c.h.b16 %v228
    %v372 = vunpack.c.l.b16 %v229
    %v373 = vunpack.c.h.b16 %v229
    %v374 = vunpack.c.l.b16 %v230
    %v375 = vunpack.c.h.b16 %v230
    %v376 = vunpack.c.l.b16 %v231
    %v377 = vunpack.c.h.b16 %v231
    %v378 = vunpack.c.l.b16 %v232
    %v379 = vunpack.c.h.b16 %v232
    %v380 = vunpack.c.l.b16 %v233
    %v381 = vunpack.c.h.b16 %v233
    %v382 = vunpack.c.l.b16 %v234
    %v383 = vunpack.c.h.b16 %v234
    %v384 = vunpack.c.l.b16 %v235
    %v385 = vunpack.c.h.b16 %v235
    %v386 = vunpack.c.l.b16 %v236
    %v387 = vunpack.c.h.b16 %v236
    %v388 = vunpack.c.l.b16 %v237
    %v389 = vunpack.c.h.b16 %v237
    %v390 = vunpack.c.l.b16 %v238
    %v391 = vunpack.c.h.b16 %v238
    %v392 = vunpack.c.l.b16 %v239
    %v393 = vunpack.c.h.b16 %v239
    %v394 = vunpack.c.l.b16 %v240
    %v395 = vunpack.c.h.b16 %v240
    %v396 = vunpack.c.l.b16 %v241
    %v397 = vunpack.c.h.b16 %v241
    %v398 = vunpack.c.l.b16 %v242
    %v399 = vunpack.c.h.b16 %v242
    %v400 = vunpack.c.l.b16 %v243
    %v401 = vunpack.c.h.b16 %v243
    %v402 = vunpack.c.l.b16 %v244
    %v403 = vunpack.c.h.b16 %v244
    %v404 = vunpack.c.l.b16 %v245
    %v405 = vunpack.c.h.b16 %v245
    %v406 = vunpack.c.l.b16 %v246
    %v407 = vunpack.c.h.b16 %v246
    %v408 = vunpack.c.l.b16 %v247
    %v409 = vunpack.c.h.b16 %v247
    %v410 = vunpack.c.l.b16 %v248
    %v411 = vunpack.c.h.b16 %v248
    %v412 = vunpack.c.l.b16 %v249
    %v413 = vunpack.c.h.b16 %v249
    %v414 = vunpack.c.l.b16 %v250
    %v415 = vunpack.c.h.b16 %v250
    %v416 = vunpack.c.l.b16 %v251
    %v417 = vunpack.c.h.b16 %v251
    %v418 = vunpack.c.l.b16 %v252
    %v419 = vunpack.c.h.b16 %v252
    %v420 = vunpack.c.l.b16 %v253
    %v421 = vunpack.c.h.b16 %v253
    %v422 = vunpack.c.l.b16 %v254
    %v423 = vunpack.c.h.b16 %v254
    %v424 = vunpack.c.l.b16 %v255
    %v425 = vunpack.c.h.b16 %v255
    %v426 = vunpack.c.l.b16 %v256
    %v427 = vunpack.c.h.b16 %v256
    %v428 = vunpack.c.l.b16 %v257
    %v429 = vunpack.c.h.b16 %v257
    %v430 = vunpack.c.l.b16 %v258
    %v431 = vunpack.c.h.b16 %v258
    %v432 = vunpack.c.l.b16 %v259
    %v433 = vunpack.c.h.b16 %v259
    %v434 = vunpack.c.l.b16 %v260
    %v435 = vunpack.c.h.b16 %v260
    %v436 = vunpack.c.l.b16 %v261
    %v437 = vunpack.c.h.b16 %v261
    %v438 = vunpack.c.l.b16 %v262
    %v439 = vunpack.c.h.b16 %v262
    %v440 = vunpack.c.l.b16 %v263
    %v441 = vunpack.c.h.b16 %v263
    %v442 = vunpack.c.l.b16 %v264
    %v443 = vunpack.c.h.b16 %v264
    %v444 = vunpack.c.l.b16 %v265
    %v445 = vunpack.c.h.b16 %v265
    %v446 = vunpack.c.l.b16 %v266
    %v447 = vunpack.c.h.b16 %v266
    %v448 = vunpack.c.l.b16 %v267
    %v449 = vunpack.c.h.b16 %v267
    %v450 = vunpack.c.l.b16 %v268
    %v451 = vunpack.c.h.b16 %v268
    %v452 = vunpack.c.l.b16 %v269
    %v453 = vunpack.c.h.b16 %v269
    %v454 = vunpack.c.l.b16 %v270
    %v455 = vunpack.c.h.b16 %v270
    %v456 = vunpack.c.l.b16 %v271
    %v457 = vunpack.c.h.b16 %v271
    %v458 = vunpack.c.l.b16 %v272
    %v459 = vunpack.c.h.b16 %v272
    %v460 = vunpack.c.l.b16 %v273
    %v461 = vunpack.c.h.b16 %v273
    %v462 = vunpack.c.l.b16 %v274
    %v463 = vunpack.c.h.b16 %v274
    %v464 = vunpack.c.l.b16 %v275
    %v465 = vunpack.c.h.b16 %v275
    %v466 = vunpack.c.l.b16 %v276
    %v467 = vunpack.c.h.b16 %v276
    %v468 = vunpack.c.l.b16 %v277
    %v469 = vunpack.c.h.b16 %v277
    %v470 = vpack.c.b16 %v346, %v342
    %v471 = vpack.c.b16 %v347, %v343
    %v472 = vpack.c.b16 %v348, %v344
    %v473 = vpack.c.b16 %v349, %v345
    %v474 = vpack.c.b16 %v354, %v350
    %v475 = vpack.c.b16 %v355, %v351
    %v476 = vpack.c.b16 %v356, %v352
    %v477 = vpack.c.b16 %v357, %v353
    %v478 = vpack.c.b16 %v362, %v358
    %v479 = vpack.c.b16 %v363, %v359
    %v480 = vpack.c.b16 %v364, %v360
    %v481 = vpack.c.b16 %v365, %v361
    %v482 = vpack.c.b16 %v370, %v366
    %v483 = vpack.c.b16 %v371, %v367
    %v484 = vpack.c.b16 %v372, %v368
    %v485 = vpack.c.b16 %v373, %v369
    %v486 = vpack.c.b16 %v378, %v374
    %v487 = vpack.c.b16 %v379, %v375
    %v488 = vpack.c.b16 %v380, %v376
    %v489 = vpack.c.b16 %v381, %v377
    %v490 = vpack.c.b16 %v386, %v382
    %v491 = vpack.c.b16 %v387, %v383
    %v492 = vpack.c.b16 %v388, %v384
    %v493 = vpack.c.b16 %v389, %v385
    %v494 = vpack.c.b16 %v394, %v390
    %v495 = vpack.c.b16 %v395, %v391
    %v496 = vpack.c.b16 %v396, %v392
    %v497 = vpack.c.b16 %v397, %v393
    %v498 = vpack.c.b16 %v402, %v398
    %v499 = vpack.c.b16 %v403, %v399
    %v500 = vpack.c.b16 %v404, %v400
    %v501 = vpack.c.b16 %v405, %v401
    %v502 = vpack.c.b16 %v410, %v406
    %v503 = vpack.c.b16 %v411, %v407
    %v504 = vpack.c.b16 %v412, %v408
    %v505 = vpack.c.b16 %v413, %v409
    %v506 = vpack.c.b16 %v418, %v414
    %v507 = vpack.c.b16 %v419, %v415
    %v508 = vpack.c.b16 %v420, %v416
    %v509 = vpack.c.b16 %v421, %v417
    %v510 = vpack.c.b16 %v426, %v422
    %v511 = vpack.c.b16 %v427, %v423
    %v512 = vpack.c.b16 %v428, %v424
    %v513 = vpack.c.b16 %v429, %v425
    %v514 = vpack.c.b16 %v434, %v430
    %v515 = vpack.c.b16 %v435, %v431
    %v516 = vpack.c.b16 %v436, %v432
    %v517 = vpack.c.b16 %v437, %v433
    %v518 = vpack.c.b16 %v442, %v438
    %v519 = vpack.c.b16 %v443, %v439
    %v520 = vpack.c.b16 %v444, %v440
    %v521 = vpack.c.b16 %v445, %v441
    %v522 = vpack.c.b16 %v450, %v446
    %v523 = vpack.c.b16 %v451, %v447
    %v524 = vpack.c.b16 %v452, %v448
    %v525 = vpack.c.b16 %v453, %v449
    %v526 = vpack.c.b16 %v458, %v454
    %v527 = vpack.c.b16 %v459, %v455
    %v528 = vpack.c.b16 %v460, %v456
    %v529 = vpack.c.b16 %v461, %v457
    %v530 = vpack.c.b16 %v466, %v462
    %v531 = vpack.c.b16 %v467, %v463
    %v532 = vpack.c.b16 %v468, %v464
    %v533 = vpack.c.b16 %v469, %v465
    %598 = vmatprep.subr.bf16.mxu0 %v471
    %599 = vmatpush1.bf16.msra.mxu0 %v470
    %600 = vmatprep.subr.bf16.mxu0 %v475
    %601 = vmatpush1.bf16.msra.mxu0 %v474
    %602 = vmatprep.subr.bf16.mxu0 %v479
    %603 = vmatpush1.bf16.msra.mxu0 %v478
    %604 = vmatprep.subr.bf16.mxu0 %v483
    %605 = vmatpush1.bf16.msra.mxu0 %v482
    %606 = vmatprep.subr.bf16.mxu0 %v487
    %607 = vmatpush1.bf16.msra.mxu0 %v486
    %608 = vmatprep.subr.bf16.mxu0 %v491
    %609 = vmatpush1.bf16.msra.mxu0 %v490
    %610 = vmatprep.subr.bf16.mxu0 %v495
    %611 = vmatpush1.bf16.msra.mxu0 %v494
    %612 = vmatprep.subr.bf16.mxu0 %v499
    %613 = vmatpush1.bf16.msra.mxu0 %v498
    %614 = vmatprep.subr.bf16.mxu0 %v503
    %615 = vmatpush1.bf16.msra.mxu0 %v502
    %616 = vmatprep.subr.bf16.mxu0 %v507
    %617 = vmatpush1.bf16.msra.mxu0 %v506
    %618 = vmatprep.subr.bf16.mxu0 %v511
    %619 = vmatpush1.bf16.msra.mxu0 %v510
    %620 = vmatprep.subr.bf16.mxu0 %v515
    %621 = vmatpush1.bf16.msra.mxu0 %v514
    %622 = vmatprep.subr.bf16.mxu0 %v519
    %623 = vmatpush1.bf16.msra.mxu0 %v518
    %624 = vmatprep.subr.bf16.mxu0 %v523
    %625 = vmatpush1.bf16.msra.mxu0 %v522
    %626 = vmatprep.subr.bf16.mxu0 %v527
    %627 = vmatpush1.bf16.msra.mxu0 %v526
    %628 = vmatprep.subr.bf16.mxu0 %v531
    %629 = vmatpush1.bf16.msra.mxu0 %v530
    %630 = vmatprep.mubr.bf16.mxu0 %v213
    %631 = vmatmul.mubr.bf16.gmra.mrb[0].mxu0 %v212
    %v632 = vpop.f32.mrb[0].mxu0
    %v633 = vadd.f32 0.0, %v632
    %v634 = vpop.f32.mrb[0].mxu0
    %v635 = vadd.f32 0.0, %v634
    %v636 = vpop.f32.mrb[0].mxu0
    %v637 = vadd.f32 0.0, %v636
    %v638 = vpop.f32.mrb[0].mxu0
    %v639 = vadd.f32 0.0, %v638
    %640 = vdwg.mxu0
    %641 = vmatprep.subr.bf16.mxu0 %v473
    %642 = vmatpush1.bf16.msra.mxu0 %v472
    %643 = vmatprep.subr.bf16.mxu0 %v477
    %644 = vmatpush1.bf16.msra.mxu0 %v476
    %645 = vmatprep.subr.bf16.mxu0 %v481
    %646 = vmatpush1.bf16.msra.mxu0 %v480
    %647 = vmatprep.subr.bf16.mxu0 %v485
    %648 = vmatpush1.bf16.msra.mxu0 %v484
    %649 = vmatprep.subr.bf16.mxu0 %v489
    %650 = vmatpush1.bf16.msra.mxu0 %v488
    %651 = vmatprep.subr.bf16.mxu0 %v493
    %652 = vmatpush1.bf16.msra.mxu0 %v492
    %653 = vmatprep.subr.bf16.mxu0 %v497
    %654 = vmatpush1.bf16.msra.mxu0 %v496
    %655 = vmatprep.subr.bf16.mxu0 %v501
    %656 = vmatpush1.bf16.msra.mxu0 %v500
    %657 = vmatprep.subr.bf16.mxu0 %v505
    %658 = vmatpush1.bf16.msra.mxu0 %v504
    %659 = vmatprep.subr.bf16.mxu0 %v509
    %660 = vmatpush1.bf16.msra.mxu0 %v508
    %661 = vmatprep.subr.bf16.mxu0 %v513
    %662 = vmatpush1.bf16.msra.mxu0 %v512
    %663 = vmatprep.subr.bf16.mxu0 %v517
    %664 = vmatpush1.bf16.msra.mxu0 %v516
    %665 = vmatprep.subr.bf16.mxu0 %v521
    %666 = vmatpush1.bf16.msra.mxu0 %v520
    %667 = vmatprep.subr.bf16.mxu0 %v525
    %668 = vmatpush1.bf16.msra.mxu0 %v524
    %669 = vmatprep.subr.bf16.mxu0 %v529
    %670 = vmatpush1.bf16.msra.mxu0 %v528
    %671 = vmatprep.subr.bf16.mxu0 %v533
    %672 = vmatpush1.bf16.msra.mxu0 %v532
    %673 = vmatprep.mubr.bf16.mxu0 %v213
    %674 = vmatmul.mubr.bf16.gmra.mrb[0].mxu0 %v212
    %v675 = vpop.f32.mrb[0].mxu0
    %v676 = vadd.f32 0.0, %v675
    %v677 = vpop.f32.mrb[0].mxu0
    %v678 = vadd.f32 0.0, %v677
    %v679 = vpop.f32.mrb[0].mxu0
    %v680 = vadd.f32 0.0, %v679
    %v681 = vpop.f32.mrb[0].mxu0
    %v682 = vadd.f32 0.0, %v681
    %683 = vdwg.mxu0
    %v684 = vpack.c.bf16 %v208, %v204
    %v685 = vpack.c.bf16 %v210, %v206
    %686 = vmatprep.subr.bf16.mxu0 %v471
    %687 = vmatpush1.bf16.msra.mxu0 %v470
    %688 = vmatprep.subr.bf16.mxu0 %v475
    %689 = vmatpush1.bf16.msra.mxu0 %v474
    %690 = vmatprep.subr.bf16.mxu0 %v479
    %691 = vmatpush1.bf16.msra.mxu0 %v478
    %692 = vmatprep.subr.bf16.mxu0 %v483
    %693 = vmatpush1.bf16.msra.mxu0 %v482
    %694 = vmatprep.subr.bf16.mxu0 %v487
    %695 = vmatpush1.bf16.msra.mxu0 %v486
    %696 = vmatprep.subr.bf16.mxu0 %v491
    %697 = vmatpush1.bf16.msra.mxu0 %v490
    %698 = vmatprep.subr.bf16.mxu0 %v495
    %699 = vmatpush1.bf16.msra.mxu0 %v494
    %700 = vmatprep.subr.bf16.mxu0 %v499
    %701 = vmatpush1.bf16.msra.mxu0 %v498
    %702 = vmatprep.subr.bf16.mxu0 %v503
    %703 = vmatpush1.bf16.msra.mxu0 %v502
    %704 = vmatprep.subr.bf16.mxu0 %v507
    %705 = vmatpush1.bf16.msra.mxu0 %v506
    %706 = vmatprep.subr.bf16.mxu0 %v511
    %707 = vmatpush1.bf16.msra.mxu0 %v510
    %708 = vmatprep.subr.bf16.mxu0 %v515
    %709 = vmatpush1.bf16.msra.mxu0 %v514
    %710 = vmatprep.subr.bf16.mxu0 %v519
    %711 = vmatpush1.bf16.msra.mxu0 %v518
    %712 = vmatprep.subr.bf16.mxu0 %v523
    %713 = vmatpush1.bf16.msra.mxu0 %v522
    %714 = vmatprep.subr.bf16.mxu0 %v527
    %715 = vmatpush1.bf16.msra.mxu0 %v526
    %716 = vmatprep.subr.bf16.mxu0 %v531
    %717 = vmatpush1.bf16.msra.mxu0 %v530
    %718 = vmatprep.mubr.bf16.mxu0 %v685
    %719 = vmatmul.mubr.bf16.gmra.mrb[0].mxu0 %v684
    %v720 = vpop.f32.mrb[0].mxu0
    %v721 = vadd.f32 0.0, %v720
    %v722 = vpop.f32.mrb[0].mxu0
    %v723 = vadd.f32 0.0, %v722
    %v724 = vpop.f32.mrb[0].mxu0
    %v725 = vadd.f32 0.0, %v724
    %v726 = vpop.f32.mrb[0].mxu0
    %v727 = vadd.f32 0.0, %v726
    %728 = vdwg.mxu0
    %729 = vmatprep.subr.bf16.mxu0 %v473
    %730 = vmatpush1.bf16.msra.mxu0 %v472
    %731 = vmatprep.subr.bf16.mxu0 %v477
    %732 = vmatpush1.bf16.msra.mxu0 %v476
    %733 = vmatprep.subr.bf16.mxu0 %v481
    %734 = vmatpush1.bf16.msra.mxu0 %v480
    %735 = vmatprep.subr.bf16.mxu0 %v485
    %736 = vmatpush1.bf16.msra.mxu0 %v484
    %737 = vmatprep.subr.bf16.mxu0 %v489
    %738 = vmatpush1.bf16.msra.mxu0 %v488
    %739 = vmatprep.subr.bf16.mxu0 %v493
    %740 = vmatpush1.bf16.msra.mxu0 %v492
    %741 = vmatprep.subr.bf16.mxu0 %v497
    %742 = vmatpush1.bf16.msra.mxu0 %v496
    %743 = vmatprep.subr.bf16.mxu0 %v501
    %744 = vmatpush1.bf16.msra.mxu0 %v500
    %745 = vmatprep.subr.bf16.mxu0 %v505
    %746 = vmatpush1.bf16.msra.mxu0 %v504
    %747 = vmatprep.subr.bf16.mxu0 %v509
    %748 = vmatpush1.bf16.msra.mxu0 %v508
    %749 = vmatprep.subr.bf16.mxu0 %v513
    %750 = vmatpush1.bf16.msra.mxu0 %v512
    %751 = vmatprep.subr.bf16.mxu0 %v517
    %752 = vmatpush1.bf16.msra.mxu0 %v516
    %753 = vmatprep.subr.bf16.mxu0 %v521
    %754 = vmatpush1.bf16.msra.mxu0 %v520
    %755 = vmatprep.subr.bf16.mxu0 %v525
    %756 = vmatpush1.bf16.msra.mxu0 %v524
    %757 = vmatprep.subr.bf16.mxu0 %v529
    %758 = vmatpush1.bf16.msra.mxu0 %v528
    %759 = vmatprep.subr.bf16.mxu0 %v533
    %760 = vmatpush1.bf16.msra.mxu0 %v532
    %761 = vmatprep.mubr.bf16.mxu0 %v685
    %762 = vmatmul.mubr.bf16.gmra.mrb[0].mxu0 %v684
    %v763 = vpop.f32.mrb[0].mxu0
    %v764 = vadd.f32 0.0, %v763
    %v765 = vpop.f32.mrb[0].mxu0
    %v766 = vadd.f32 0.0, %v765
    %v767 = vpop.f32.mrb[0].mxu0
    %v768 = vadd.f32 0.0, %v767
    %v769 = vpop.f32.mrb[0].mxu0
    %v770 = vadd.f32 0.0, %v769
    %771 = vdwg.mxu0
    %v772 = vmul.f32 %v633, %v721
    %v773 = vmul.f32 %v635, %v723
    %v774 = vmul.f32 %v676, %v764
    %v775 = vmul.f32 %v678, %v766
    %v776 = vmul.f32 %v637, %v725
    %v777 = vmul.f32 %v639, %v727
    %v778 = vmul.f32 %v680, %v768
    %v779 = vmul.f32 %v682, %v770
    %v780 = vpack.c.bf16 %v776, %v772
    %v781 = vpack.c.bf16 %v777, %v773
    %v782 = vpack.c.bf16 %v778, %v774
    %v783 = vpack.c.bf16 %v779, %v775
    %v784 = vld [vmem:[#allocation6] sm:$0xff]
    %v785 = vld [vmem:[#allocation6 + $0x8] sm:$0xff]
    %v786 = vld [vmem:[#allocation6 + $0x10] sm:$0xff]
    %v787 = vld [vmem:[#allocation6 + $0x18] sm:$0xff]
    %v788 = vld [vmem:[#allocation6 + $0x20] sm:$0xff]
    %v789 = vld [vmem:[#allocation6 + $0x28] sm:$0xff]
    %v790 = vld [vmem:[#allocation6 + $0x30] sm:$0xff]
    %v791 = vld [vmem:[#allocation6 + $0x38] sm:$0xff]
    %v792 = vld [vmem:[#allocation6 + $0x40] sm:$0xff]
    %v793 = vld [vmem:[#allocation6 + $0x48] sm:$0xff]
    %v794 = vld [vmem:[#allocation6 + $0x50] sm:$0xff]
    %v795 = vld [vmem:[#allocation6 + $0x58] sm:$0xff]
    %v796 = vld [vmem:[#allocation6 + $0x60] sm:$0xff]
    %v797 = vld [vmem:[#allocation6 + $0x68] sm:$0xff]
    %v798 = vld [vmem:[#allocation6 + $0x70] sm:$0xff]
    %v799 = vld [vmem:[#allocation6 + $0x78] sm:$0xff]
    %v800 = vld [vmem:[#allocation6 + $0x80] sm:$0xff]
    %v801 = vld [vmem:[#allocation6 + $0x88] sm:$0xff]
    %v802 = vld [vmem:[#allocation6 + $0x90] sm:$0xff]
    %v803 = vld [vmem:[#allocation6 + $0x98] sm:$0xff]
    %v804 = vld [vmem:[#allocation6 + $0xa0] sm:$0xff]
    %v805 = vld [vmem:[#allocation6 + $0xa8] sm:$0xff]
    %v806 = vld [vmem:[#allocation6 + $0xb0] sm:$0xff]
    %v807 = vld [vmem:[#allocation6 + $0xb8] sm:$0xff]
    %v808 = vld [vmem:[#allocation6 + $0xc0] sm:$0xff]
    %v809 = vld [vmem:[#allocation6 + $0xc8] sm:$0xff]
    %v810 = vld [vmem:[#allocation6 + $0xd0] sm:$0xff]
    %v811 = vld [vmem:[#allocation6 + $0xd8] sm:$0xff]
    %v812 = vld [vmem:[#allocation6 + $0xe0] sm:$0xff]
    %v813 = vld [vmem:[#allocation6 + $0xe8] sm:$0xff]
    %v814 = vld [vmem:[#allocation6 + $0xf0] sm:$0xff]
    %v815 = vld [vmem:[#allocation6 + $0xf8] sm:$0xff]
    %v816 = vld [vmem:[#allocation6 + $0x100] sm:$0xff]
    %v817 = vld [vmem:[#allocation6 + $0x108] sm:$0xff]
    %v818 = vld [vmem:[#allocation6 + $0x110] sm:$0xff]
    %v819 = vld [vmem:[#allocation6 + $0x118] sm:$0xff]
    %v820 = vld [vmem:[#allocation6 + $0x120] sm:$0xff]
    %v821 = vld [vmem:[#allocation6 + $0x128] sm:$0xff]
    %v822 = vld [vmem:[#allocation6 + $0x130] sm:$0xff]
    %v823 = vld [vmem:[#allocation6 + $0x138] sm:$0xff]
    %v824 = vld [vmem:[#allocation6 + $0x140] sm:$0xff]
    %v825 = vld [vmem:[#allocation6 + $0x148] sm:$0xff]
    %v826 = vld [vmem:[#allocation6 + $0x150] sm:$0xff]
    %v827 = vld [vmem:[#allocation6 + $0x158] sm:$0xff]
    %v828 = vld [vmem:[#allocation6 + $0x160] sm:$0xff]
    %v829 = vld [vmem:[#allocation6 + $0x168] sm:$0xff]
    %v830 = vld [vmem:[#allocation6 + $0x170] sm:$0xff]
    %v831 = vld [vmem:[#allocation6 + $0x178] sm:$0xff]
    %v832 = vld [vmem:[#allocation6 + $0x180] sm:$0xff]
    %v833 = vld [vmem:[#allocation6 + $0x188] sm:$0xff]
    %v834 = vld [vmem:[#allocation6 + $0x190] sm:$0xff]
    %v835 = vld [vmem:[#allocation6 + $0x198] sm:$0xff]
    %v836 = vld [vmem:[#allocation6 + $0x1a0] sm:$0xff]
    %v837 = vld [vmem:[#allocation6 + $0x1a8] sm:$0xff]
    %v838 = vld [vmem:[#allocation6 + $0x1b0] sm:$0xff]
    %v839 = vld [vmem:[#allocation6 + $0x1b8] sm:$0xff]
    %v840 = vld [vmem:[#allocation6 + $0x1c0] sm:$0xff]
    %v841 = vld [vmem:[#allocation6 + $0x1c8] sm:$0xff]
    %v842 = vld [vmem:[#allocation6 + $0x1d0] sm:$0xff]
    %v843 = vld [vmem:[#allocation6 + $0x1d8] sm:$0xff]
    %v844 = vld [vmem:[#allocation6 + $0x1e0] sm:$0xff]
    %v845 = vld [vmem:[#allocation6 + $0x1e8] sm:$0xff]
    %v846 = vld [vmem:[#allocation6 + $0x1f0] sm:$0xff]
    %v847 = vld [vmem:[#allocation6 + $0x1f8] sm:$0xff]
    %v912 = vunpack.c.l.b16 %v784
    %v913 = vunpack.c.h.b16 %v784
    %v914 = vunpack.c.l.b16 %v785
    %v915 = vunpack.c.h.b16 %v785
    %v916 = vunpack.c.l.b16 %v786
    %v917 = vunpack.c.h.b16 %v786
    %v918 = vunpack.c.l.b16 %v787
    %v919 = vunpack.c.h.b16 %v787
    %v920 = vunpack.c.l.b16 %v788
    %v921 = vunpack.c.h.b16 %v788
    %v922 = vunpack.c.l.b16 %v789
    %v923 = vunpack.c.h.b16 %v789
    %v924 = vunpack.c.l.b16 %v790
    %v925 = vunpack.c.h.b16 %v790
    %v926 = vunpack.c.l.b16 %v791
    %v927 = vunpack.c.h.b16 %v791
    %v928 = vunpack.c.l.b16 %v792
    %v929 = vunpack.c.h.b16 %v792
    %v930 = vunpack.c.l.b16 %v793
    %v931 = vunpack.c.h.b16 %v793
    %v932 = vunpack.c.l.b16 %v794
    %v933 = vunpack.c.h.b16 %v794
    %v934 = vunpack.c.l.b16 %v795
    %v935 = vunpack.c.h.b16 %v795
    %v936 = vunpack.c.l.b16 %v796
    %v937 = vunpack.c.h.b16 %v796
    %v938 = vunpack.c.l.b16 %v797
    %v939 = vunpack.c.h.b16 %v797
    %v940 = vunpack.c.l.b16 %v798
    %v941 = vunpack.c.h.b16 %v798
    %v942 = vunpack.c.l.b16 %v799
    %v943 = vunpack.c.h.b16 %v799
    %v944 = vunpack.c.l.b16 %v800
    %v945 = vunpack.c.h.b16 %v800
    %v946 = vunpack.c.l.b16 %v801
    %v947 = vunpack.c.h.b16 %v801
    %v948 = vunpack.c.l.b16 %v802
    %v949 = vunpack.c.h.b16 %v802
    %v950 = vunpack.c.l.b16 %v803
    %v951 = vunpack.c.h.b16 %v803
    %v952 = vunpack.c.l.b16 %v804
    %v953 = vunpack.c.h.b16 %v804
    %v954 = vunpack.c.l.b16 %v805
    %v955 = vunpack.c.h.b16 %v805
    %v956 = vunpack.c.l.b16 %v806
    %v957 = vunpack.c.h.b16 %v806
    %v958 = vunpack.c.l.b16 %v807
    %v959 = vunpack.c.h.b16 %v807
    %v960 = vunpack.c.l.b16 %v808
    %v961 = vunpack.c.h.b16 %v808
    %v962 = vunpack.c.l.b16 %v809
    %v963 = vunpack.c.h.b16 %v809
    %v964 = vunpack.c.l.b16 %v810
    %v965 = vunpack.c.h.b16 %v810
    %v966 = vunpack.c.l.b16 %v811
    %v967 = vunpack.c.h.b16 %v811
    %v968 = vunpack.c.l.b16 %v812
    %v969 = vunpack.c.h.b16 %v812
    %v970 = vunpack.c.l.b16 %v813
    %v971 = vunpack.c.h.b16 %v813
    %v972 = vunpack.c.l.b16 %v814
    %v973 = vunpack.c.h.b16 %v814
    %v974 = vunpack.c.l.b16 %v815
    %v975 = vunpack.c.h.b16 %v815
    %v976 = vunpack.c.l.b16 %v816
    %v977 = vunpack.c.h.b16 %v816
    %v978 = vunpack.c.l.b16 %v817
    %v979 = vunpack.c.h.b16 %v817
    %v980 = vunpack.c.l.b16 %v818
    %v981 = vunpack.c.h.b16 %v818
    %v982 = vunpack.c.l.b16 %v819
    %v983 = vunpack.c.h.b16 %v819
    %v984 = vunpack.c.l.b16 %v820
    %v985 = vunpack.c.h.b16 %v820
    %v986 = vunpack.c.l.b16 %v821
    %v987 = vunpack.c.h.b16 %v821
    %v988 = vunpack.c.l.b16 %v822
    %v989 = vunpack.c.h.b16 %v822
    %v990 = vunpack.c.l.b16 %v823
    %v991 = vunpack.c.h.b16 %v823
    %v992 = vunpack.c.l.b16 %v824
    %v993 = vunpack.c.h.b16 %v824
    %v994 = vunpack.c.l.b16 %v825
    %v995 = vunpack.c.h.b16 %v825
    %v996 = vunpack.c.l.b16 %v826
    %v997 = vunpack.c.h.b16 %v826
    %v998 = vunpack.c.l.b16 %v827
    %v999 = vunpack.c.h.b16 %v827
    %v1000 = vunpack.c.l.b16 %v828
    %v1001 = vunpack.c.h.b16 %v828
    %v1002 = vunpack.c.l.b16 %v829
    %v1003 = vunpack.c.h.b16 %v829
    %v1004 = vunpack.c.l.b16 %v830
    %v1005 = vunpack.c.h.b16 %v830
    %v1006 = vunpack.c.l.b16 %v831
    %v1007 = vunpack.c.h.b16 %v831
    %v1008 = vunpack.c.l.b16 %v832
    %v1009 = vunpack.c.h.b16 %v832
    %v1010 = vunpack.c.l.b16 %v833
    %v1011 = vunpack.c.h.b16 %v833
    %v1012 = vunpack.c.l.b16 %v834
    %v1013 = vunpack.c.h.b16 %v834
    %v1014 = vunpack.c.l.b16 %v835
    %v1015 = vunpack.c.h.b16 %v835
    %v1016 = vunpack.c.l.b16 %v836
    %v1017 = vunpack.c.h.b16 %v836
    %v1018 = vunpack.c.l.b16 %v837
    %v1019 = vunpack.c.h.b16 %v837
    %v1020 = vunpack.c.l.b16 %v838
    %v1021 = vunpack.c.h.b16 %v838
    %v1022 = vunpack.c.l.b16 %v839
    %v1023 = vunpack.c.h.b16 %v839
    %v1024 = vunpack.c.l.b16 %v840
    %v1025 = vunpack.c.h.b16 %v840
    %v1026 = vunpack.c.l.b16 %v841
    %v1027 = vunpack.c.h.b16 %v841
    %v1028 = vunpack.c.l.b16 %v842
    %v1029 = vunpack.c.h.b16 %v842
    %v1030 = vunpack.c.l.b16 %v843
    %v1031 = vunpack.c.h.b16 %v843
    %v1032 = vunpack.c.l.b16 %v844
    %v1033 = vunpack.c.h.b16 %v844
    %v1034 = vunpack.c.l.b16 %v845
    %v1035 = vunpack.c.h.b16 %v845
    %v1036 = vunpack.c.l.b16 %v846
    %v1037 = vunpack.c.h.b16 %v846
    %v1038 = vunpack.c.l.b16 %v847
    %v1039 = vunpack.c.h.b16 %v847
    %v1040 = vpack.c.b16 %v914, %v912
    %v1041 = vpack.c.b16 %v915, %v913
    %v1042 = vpack.c.b16 %v918, %v916
    %v1043 = vpack.c.b16 %v919, %v917
    %v1044 = vpack.c.b16 %v922, %v920
    %v1045 = vpack.c.b16 %v923, %v921
    %v1046 = vpack.c.b16 %v926, %v924
    %v1047 = vpack.c.b16 %v927, %v925
    %v1048 = vpack.c.b16 %v930, %v928
    %v1049 = vpack.c.b16 %v931, %v929
    %v1050 = vpack.c.b16 %v934, %v932
    %v1051 = vpack.c.b16 %v935, %v933
    %v1052 = vpack.c.b16 %v938, %v936
    %v1053 = vpack.c.b16 %v939, %v937
    %v1054 = vpack.c.b16 %v942, %v940
    %v1055 = vpack.c.b16 %v943, %v941
    %v1056 = vpack.c.b16 %v946, %v944
    %v1057 = vpack.c.b16 %v947, %v945
    %v1058 = vpack.c.b16 %v950, %v948
    %v1059 = vpack.c.b16 %v951, %v949
    %v1060 = vpack.c.b16 %v954, %v952
    %v1061 = vpack.c.b16 %v955, %v953
    %v1062 = vpack.c.b16 %v958, %v956
    %v1063 = vpack.c.b16 %v959, %v957
    %v1064 = vpack.c.b16 %v962, %v960
    %v1065 = vpack.c.b16 %v963, %v961
    %v1066 = vpack.c.b16 %v966, %v964
    %v1067 = vpack.c.b16 %v967, %v965
    %v1068 = vpack.c.b16 %v970, %v968
    %v1069 = vpack.c.b16 %v971, %v969
    %v1070 = vpack.c.b16 %v974, %v972
    %v1071 = vpack.c.b16 %v975, %v973
    %v1072 = vpack.c.b16 %v978, %v976
    %v1073 = vpack.c.b16 %v979, %v977
    %v1074 = vpack.c.b16 %v982, %v980
    %v1075 = vpack.c.b16 %v983, %v981
    %v1076 = vpack.c.b16 %v986, %v984
    %v1077 = vpack.c.b16 %v987, %v985
    %v1078 = vpack.c.b16 %v990, %v988
    %v1079 = vpack.c.b16 %v991, %v989
    %v1080 = vpack.c.b16 %v994, %v992
    %v1081 = vpack.c.b16 %v995, %v993
    %v1082 = vpack.c.b16 %v998, %v996
    %v1083 = vpack.c.b16 %v999, %v997
    %v1084 = vpack.c.b16 %v1002, %v1000
    %v1085 = vpack.c.b16 %v1003, %v1001
    %v1086 = vpack.c.b16 %v1006, %v1004
    %v1087 = vpack.c.b16 %v1007, %v1005
    %v1088 = vpack.c.b16 %v1010, %v1008
    %v1089 = vpack.c.b16 %v1011, %v1009
    %v1090 = vpack.c.b16 %v1014, %v1012
    %v1091 = vpack.c.b16 %v1015, %v1013
    %v1092 = vpack.c.b16 %v1018, %v1016
    %v1093 = vpack.c.b16 %v1019, %v1017
    %v1094 = vpack.c.b16 %v1022, %v1020
    %v1095 = vpack.c.b16 %v1023, %v1021
    %v1096 = vpack.c.b16 %v1026, %v1024
    %v1097 = vpack.c.b16 %v1027, %v1025
    %v1098 = vpack.c.b16 %v1030, %v1028
    %v1099 = vpack.c.b16 %v1031, %v1029
    %v1100 = vpack.c.b16 %v1034, %v1032
    %v1101 = vpack.c.b16 %v1035, %v1033
    %v1102 = vpack.c.b16 %v1038, %v1036
    %v1103 = vpack.c.b16 %v1039, %v1037
    %1168 = vmatprep.subr.bf16.mxu0 %v1041
    %1169 = vmatpush1.bf16.msra.mxu0 %v1040
    %1170 = vmatprep.subr.bf16.mxu0 %v1043
    %1171 = vmatpush1.bf16.msra.mxu0 %v1042
    %1172 = vmatprep.subr.bf16.mxu0 %v1045
    %1173 = vmatpush1.bf16.msra.mxu0 %v1044
    %1174 = vmatprep.subr.bf16.mxu0 %v1047
    %1175 = vmatpush1.bf16.msra.mxu0 %v1046
    %1176 = vmatprep.subr.bf16.mxu0 %v1049
    %1177 = vmatpush1.bf16.msra.mxu0 %v1048
    %1178 = vmatprep.subr.bf16.mxu0 %v1051
    %1179 = vmatpush1.bf16.msra.mxu0 %v1050
    %1180 = vmatprep.subr.bf16.mxu0 %v1053
    %1181 = vmatpush1.bf16.msra.mxu0 %v1052
    %1182 = vmatprep.subr.bf16.mxu0 %v1055
    %1183 = vmatpush1.bf16.msra.mxu0 %v1054
    %1184 = vmatprep.subr.bf16.mxu0 %v1057
    %1185 = vmatpush1.bf16.msra.mxu0 %v1056
    %1186 = vmatprep.subr.bf16.mxu0 %v1059
    %1187 = vmatpush1.bf16.msra.mxu0 %v1058
    %1188 = vmatprep.subr.bf16.mxu0 %v1061
    %1189 = vmatpush1.bf16.msra.mxu0 %v1060
    %1190 = vmatprep.subr.bf16.mxu0 %v1063
    %1191 = vmatpush1.bf16.msra.mxu0 %v1062
    %1192 = vmatprep.subr.bf16.mxu0 %v1065
    %1193 = vmatpush1.bf16.msra.mxu0 %v1064
    %1194 = vmatprep.subr.bf16.mxu0 %v1067
    %1195 = vmatpush1.bf16.msra.mxu0 %v1066
    %1196 = vmatprep.subr.bf16.mxu0 %v1069
    %1197 = vmatpush1.bf16.msra.mxu0 %v1068
    %1198 = vmatprep.subr.bf16.mxu0 %v1071
    %1199 = vmatpush1.bf16.msra.mxu0 %v1070
    %1200 = vmatprep.mubr.bf16.mxu0 %v781
    %1201 = vmatmul.mubr.bf16.gmra.mrb[0].mxu0 %v780
    %v1202 = vpop.f32.mrb[0].mxu0
    %v1203 = vadd.f32 0.0, %v1202
    %v1204 = vpop.f32.mrb[0].mxu0
    %v1205 = vadd.f32 0.0, %v1204
    %v1206 = vpop.f32.mrb[0].mxu0
    %v1207 = vadd.f32 0.0, %v1206
    %v1208 = vpop.f32.mrb[0].mxu0
    %v1209 = vadd.f32 0.0, %v1208
    %1210 = vdwg.mxu0
    %1211 = vmatprep.subr.bf16.mxu0 %v1073
    %1212 = vmatpush1.bf16.msra.mxu0 %v1072
    %1213 = vmatprep.subr.bf16.mxu0 %v1075
    %1214 = vmatpush1.bf16.msra.mxu0 %v1074
    %1215 = vmatprep.subr.bf16.mxu0 %v1077
    %1216 = vmatpush1.bf16.msra.mxu0 %v1076
    %1217 = vmatprep.subr.bf16.mxu0 %v1079
    %1218 = vmatpush1.bf16.msra.mxu0 %v1078
    %1219 = vmatprep.subr.bf16.mxu0 %v1081
    %1220 = vmatpush1.bf16.msra.mxu0 %v1080
    %1221 = vmatprep.subr.bf16.mxu0 %v1083
    %1222 = vmatpush1.bf16.msra.mxu0 %v1082
    %1223 = vmatprep.subr.bf16.mxu0 %v1085
    %1224 = vmatpush1.bf16.msra.mxu0 %v1084
    %1225 = vmatprep.subr.bf16.mxu0 %v1087
    %1226 = vmatpush1.bf16.msra.mxu0 %v1086
    %1227 = vmatprep.subr.bf16.mxu0 %v1089
    %1228 = vmatpush1.bf16.msra.mxu0 %v1088
    %1229 = vmatprep.subr.bf16.mxu0 %v1091
    %1230 = vmatpush1.bf16.msra.mxu0 %v1090
    %1231 = vmatprep.subr.bf16.mxu0 %v1093
    %1232 = vmatpush1.bf16.msra.mxu0 %v1092
    %1233 = vmatprep.subr.bf16.mxu0 %v1095
    %1234 = vmatpush1.bf16.msra.mxu0 %v1094
    %1235 = vmatprep.subr.bf16.mxu0 %v1097
    %1236 = vmatpush1.bf16.msra.mxu0 %v1096
    %1237 = vmatprep.subr.bf16.mxu0 %v1099
    %1238 = vmatpush1.bf16.msra.mxu0 %v1098
    %1239 = vmatprep.subr.bf16.mxu0 %v1101
    %1240 = vmatpush1.bf16.msra.mxu0 %v1100
    %1241 = vmatprep.subr.bf16.mxu0 %v1103
    %1242 = vmatpush1.bf16.msra.mxu0 %v1102
    %1243 = vmatprep.mubr.bf16.mxu0 %v783
    %1244 = vmatmul.mubr.bf16.gmra.mrb[0].mxu0 %v782
    %v1245 = vpop.f32.mrb[0].mxu0
    %v1246 = vadd.f32 %v1203, %v1245
    %v1247 = vpop.f32.mrb[0].mxu0
    %v1248 = vadd.f32 %v1205, %v1247
    %v1249 = vpop.f32.mrb[0].mxu0
    %v1250 = vadd.f32 %v1207, %v1249
    %v1251 = vpop.f32.mrb[0].mxu0
    %v1252 = vadd.f32 %v1209, %v1251
    %1253 = vdwg.mxu0
    %1254 = vst [vmem:[%s6] sm:$0xff] %v1246
    %1255 = vst [vmem:[%s6 + $0x8] sm:$0xff] %v1248
    %1256 = vst [vmem:[%s6 + $0x10] sm:$0xff] %v1250
    %1257 = vst [vmem:[%s6 + $0x18] sm:$0xff] %v1252
    // Predicated region
    $region38: #{_mcb_pallas.1} parent=1 // pred_check
      _
    $region39: #{_mcb_pallas.1} parent=1 // pred_check_branch
      %1259 = sbr.rel (0) target = $region41
    $region40: #{_mcb_pallas.1} parent=1 // pred_region
      _
    $region41: #{_mcb_pallas.1} parent=1 // pred_fallthru
      _
    // Predicated region
    $region42: #{_mcb_pallas.1} parent=1 // pred_check
      _
    $region43: #{_mcb_pallas.1} parent=1 // pred_check_branch
      %1261 = sbr.rel (0) target = $region45
    $region44: #{_mcb_pallas.1} parent=1 // pred_region
      _
    $region45: #{_mcb_pallas.1} parent=1 // pred_fallthru
      _
    %1262 = vsyncpa [#allocation3], 1
    %1263 = vsyncpa [#allocation5], 1

// kernel: _mcb_pallas.1
$region0: #{_mcb_pallas.1}
  #allocation0 [shape = 'u32[]', space=smem, size = 0x4, offset = 0x4, fixed_abs, tag = 'smem constant byte address 0x4 - core index']
  #allocation1 [shape = 'u32[144,128]{1,0:T(1,128)}', space=vmem, size = 0x12000, scoped, tag = 'internal scratch']
  %s0 = inlined_call_operand.vmem [shape: f32[16,32], index: 0, kind: input, shape index: {}]
  %s1 = inlined_call_operand.vmem [shape: f32[16,32], index: 1, kind: input, shape index: {}]
  %s2 = inlined_call_operand.vmem [shape: bf16[32,256], index: 2, kind: input, shape index: {}]
  %s3 = inlined_call_operand.hbm [shape: bf16[32,256], index: 3, kind: input, shape index: {}]
  %s4 = inlined_call_operand.hbm [shape: bf16[256,512], index: 4, kind: input, shape index: {}]
  %s5 = inlined_call_operand.hbm [shape: bf16[512,256], index: 5, kind: input, shape index: {}]
  %s6 = inlined_call_operand.vmem [shape: f32[16,256], index: 6, kind: output, shape index: {}]
  %s7 = sld [smem:[#allocation0]]
  $region46: #{_mcb_pallas.1} parent=0
    _
  %s9 = ssub.s32 1, %s7
  %s10 = scalar_select 0, %s9, %s7
  $region1: #{_mcb_pallas.1} parent=0
    #allocation2 [shape = 'u8[16384]{0}', space=vmem, size = 0x4000, scoped, tag = 'input window, operand 3, single buffered']
    #allocation3 [shape = 's32[1]{0}', space=sflag, size = 0x4, scoped, tag = 'scoped memory for _mcb_pallas.1']
    #allocation4 [shape = 'u8[262144]{0}', space=vmem, size = 0x40000, scoped, tag = 'input window, operand 4, single buffered']
    #allocation5 [shape = 's32[1]{0}', space=sflag, size = 0x4, scoped, tag = 'scoped memory for _mcb_pallas.1']
    #allocation6 [shape = 'u8[262144]{0}', space=vmem, size = 0x40000, scoped, tag = 'input window, operand 5, single buffered']
    %11 = vsyncpa [#allocation3], 0
    %12 = vsyncpa [#allocation5], 0
    // Predicated region
    $region2: #{_mcb_pallas.1} parent=1 // pred_check
      _
    $region3: #{_mcb_pallas.1} parent=1 // pred_check_branch
      %14 = sbr.rel (0) target = $region5
    $region4: #{_mcb_pallas.1} parent=1 // pred_region
      _
    $region5: #{_mcb_pallas.1} parent=1 // pred_fallthru
      _
    // Predicated region
    $region6: #{_mcb_pallas.1} parent=1 // pred_check
      _
    $region7: #{_mcb_pallas.1} parent=1 // pred_check_branch
      %16 = sbr.rel (0) target = $region9
    $region8: #{_mcb_pallas.1} parent=1 // pred_region
      _
    $region9: #{_mcb_pallas.1} parent=1 // pred_fallthru
      _
    // Predicated region
    $region10: #{_mcb_pallas.1} parent=1 // pred_check
      _
    $region11: #{_mcb_pallas.1} parent=1 // pred_check_branch
      %18 = sbr.rel (0) target = $region13
    $region12: #{_mcb_pallas.1} parent=1 // pred_region
      _
    $region13: #{_mcb_pallas.1} parent=1 // pred_fallthru
      _
    // Predicated region
    $region14: #{_mcb_pallas.1} parent=1 // pred_check
      _
    $region15: #{_mcb_pallas.1} parent=1 // pred_check_branch
      %20 = sbr.rel (0) target = $region17
    $region16: #{_mcb_pallas.1} parent=1 // pred_region
      %s22 = ssub.s32 512, 512
      %23 = vsyncadd [#allocation3], %s22
      %s24 = sshll.u32 [#allocation2], 4
      %s25 = int_to_ptr.vmem [resolvable:$true] %s24
      %30 = dma.hbm_to_vmem [thread:$0]  %s3, 512, %s25, [#allocation3], 128, 128, 8
    $region17: #{_mcb_pallas.1} parent=1 // pred_fallthru
      _
    // Predicated region
    $region18: #{_mcb_pallas.1} parent=1 // pred_check
      _
    $region19: #{_mcb_pallas.1} parent=1 // pred_check_branch
      %32 = sbr.rel (0) target = $region21
    $region20: #{_mcb_pallas.1} parent=1 // pred_region
      %s34 = ssub.s32 8192, 8192
      %35 = vsyncadd [#allocation5], %s34
      %s36 = sshll.u32 [#allocation4], 4
      %s37 = int_to_ptr.vmem [resolvable:$true] %s36
      %42 = dma.hbm_to_vmem [thread:$0]  %s4, 8192, %s37, [#allocation5], 256, 256, 16
    $region21: #{_mcb_pallas.1} parent=1 // pred_fallthru
      _
    // Predicated region
    $region22: #{_mcb_pallas.1} parent=1 // pred_check
      _
    $region23: #{_mcb_pallas.1} parent=1 // pred_check_branch
      %44 = sbr.rel (0) target = $region25
    $region24: #{_mcb_pallas.1} parent=1 // pred_region
      %s46 = ssub.s32 8192, 8192
      %47 = vsyncadd [#allocation5], %s46
      %s48 = sshll.u32 [#allocation6], 4
      %s49 = int_to_ptr.vmem [resolvable:$true] %s48
      %54 = dma.hbm_to_vmem [thread:$0]  %s5, 8192, %s49, [#allocation5], 128, 128, 8
    $region25: #{_mcb_pallas.1} parent=1 // pred_fallthru
      _
    // Predicated region
    $region26: #{_mcb_pallas.1} parent=1 // pred_check
      _
    $region27: #{_mcb_pallas.1} parent=1 // pred_check_branch
      %56 = sbr.rel (0) target = $region29
    $region28: #{_mcb_pallas.1} parent=1 // pred_region
      %57 = dma.done [#allocation3], 512
    $region29: #{_mcb_pallas.1} parent=1 // pred_fallthru
      _
    // Predicated region
    $region30: #{_mcb_pallas.1} parent=1 // pred_check
      _
    $region31: #{_mcb_pallas.1} parent=1 // pred_check_branch
      %59 = sbr.rel (0) target = $region33
    $region32: #{_mcb_pallas.1} parent=1 // pred_region
      %60 = dma.done [#allocation5], 8192
    $region33: #{_mcb_pallas.1} parent=1 // pred_fallthru
      _
    // Predicated region
    $region34: #{_mcb_pallas.1} parent=1 // pred_check
      _
    $region35: #{_mcb_pallas.1} parent=1 // pred_check_branch
      %62 = sbr.rel (0) target = $region37
    $region36: #{_mcb_pallas.1} parent=1 // pred_region
      %63 = dma.done [#allocation5], 8192
    $region37: #{_mcb_pallas.1} parent=1 // pred_fallthru
      _
    %v65 = vld [vmem:[%s0] sm:$0xff]
    %v66 = vld [vmem:[%s0 + $0x8] sm:$0xff]
    %v67 = vpack.c.bf16 %v66, %v65
    %v68 = vld [vmem:[%s1] sm:$0xff]
    %v69 = vld [vmem:[%s1 + $0x8] sm:$0xff]
    %v70 = vpack.c.bf16 %v69, %v68
    %v71 = vld [vmem:[%s2] sm:$0xff]
    %v72 = vld [vmem:[%s2 + $0x8] sm:$0xff]
    %v73 = vld [vmem:[%s2 + $0x10] sm:$0xff]
    %v74 = vld [vmem:[%s2 + $0x18] sm:$0xff]
    %v79 = vunpack.c.l.b16 %v71
    %v80 = vunpack.c.h.b16 %v71
    %v81 = vunpack.c.l.b16 %v72
    %v82 = vunpack.c.h.b16 %v72
    %v83 = vunpack.c.l.b16 %v73
    %v84 = vunpack.c.h.b16 %v73
    %v85 = vunpack.c.l.b16 %v74
    %v86 = vunpack.c.h.b16 %v74
    %v87 = vpack.c.b16 %v81, %v79
    %v88 = vpack.c.b16 %v82, %v80
    %v89 = vpack.c.b16 %v85, %v83
    %v90 = vpack.c.b16 %v86, %v84
    %vm95 = vcmask 261120
    %v97 = vsel %vm95, %v67, 0
    %99 = vmatprep.subr.bf16.mxu0 %v88
    %100 = vmatpush1.bf16.msra.mxu0 %v87
    %101 = vmatprep.subr.bf16.mxu0 %v90
    %102 = vmatpush1.bf16.msra.mxu0 %v89
    %103 = vmatprep.subr.bf16.mxu0 0
    %104 = vmatpush1.bf16.msra.mxu0 0
    %105 = vmatprep.subr.bf16.mxu0 0
    %106 = vmatpush1.bf16.msra.mxu0 0
    %107 = vmatprep.subr.bf16.mxu0 0
    %108 = vmatpush1.bf16.msra.mxu0 0
    %109 = vmatprep.subr.bf16.mxu0 0
    %110 = vmatpush1.bf16.msra.mxu0 0
    %111 = vmatprep.subr.bf16.mxu0 0
    %112 = vmatpush1.bf16.msra.mxu0 0
    %113 = vmatprep.subr.bf16.mxu0 0
    %114 = vmatpush1.bf16.msra.mxu0 0
    %115 = vmatprep.subr.bf16.mxu0 0
    %116 = vmatpush1.bf16.msra.mxu0 0
    %117 = vmatprep.subr.bf16.mxu0 0
    %118 = vmatpush1.bf16.msra.mxu0 0
    %119 = vmatprep.subr.bf16.mxu0 0
    %120 = vmatpush1.bf16.msra.mxu0 0
    %121 = vmatprep.subr.bf16.mxu0 0
    %122 = vmatpush1.bf16.msra.mxu0 0
    %123 = vmatprep.subr.bf16.mxu0 0
    %124 = vmatpush1.bf16.msra.mxu0 0
    %125 = vmatprep.subr.bf16.mxu0 0
    %126 = vmatpush1.bf16.msra.mxu0 0
    %127 = vmatprep.subr.bf16.mxu0 0
    %128 = vmatpush1.bf16.msra.mxu0 0
    %129 = vmatprep.subr.bf16.mxu0 0
    %130 = vmatpush1.bf16.msra.mxu0 0
    %131 = vmatprep.mubr.bf16.mxu0 0
    %132 = vmatmul.mubr.bf16.gmra.mrb[0].mxu0 %v97
    %v133 = vpop.f32.mrb[0].mxu0
    %v134 = vadd.f32 0.0, %v133
    %v135 = vpop.f32.mrb[0].mxu0
    %v136 = vadd.f32 0.0, %v135
    %v137 = vpop.f32.mrb[0].mxu0
    %v138 = vadd.f32 0.0, %v137
    %v139 = vpop.f32.mrb[0].mxu0
    %v140 = vadd.f32 0.0, %v139
    %141 = vdwg.mxu0
    %v142 = vld [vmem:[#allocation2] sm:$0xff]
    %v143 = vld [vmem:[#allocation2 + $0x8] sm:$0xff]
    %v144 = vld [vmem:[#allocation2 + $0x10] sm:$0xff]
    %v145 = vld [vmem:[#allocation2 + $0x18] sm:$0xff]
    %v150 = vunpack.c.l.b16 %v142
    %v151 = vunpack.c.h.b16 %v142
    %v152 = vunpack.c.l.b16 %v143
    %v153 = vunpack.c.h.b16 %v143
    %v154 = vunpack.c.l.b16 %v144
    %v155 = vunpack.c.h.b16 %v144
    %v156 = vunpack.c.l.b16 %v145
    %v157 = vunpack.c.h.b16 %v145
    %v158 = vpack.c.b16 %v152, %v150
    %v159 = vpack.c.b16 %v153, %v151
    %v160 = vpack.c.b16 %v156, %v154
    %v161 = vpack.c.b16 %v157, %v155
    %v167 = vsel %vm95, %v70, 0
    %169 = vmatprep.subr.bf16.mxu0 %v159
    %170 = vmatpush1.bf16.msra.mxu0 %v158
    %171 = vmatprep.subr.bf16.mxu0 %v161
    %172 = vmatpush1.bf16.msra.mxu0 %v160
    %173 = vmatprep.subr.bf16.mxu0 0
    %174 = vmatpush1.bf16.msra.mxu0 0
    %175 = vmatprep.subr.bf16.mxu0 0
    %176 = vmatpush1.bf16.msra.mxu0 0
    %177 = vmatprep.subr.bf16.mxu0 0
    %178 = vmatpush1.bf16.msra.mxu0 0
    %179 = vmatprep.subr.bf16.mxu0 0
    %180 = vmatpush1.bf16.msra.mxu0 0
    %181 = vmatprep.subr.bf16.mxu0 0
    %182 = vmatpush1.bf16.msra.mxu0 0
    %183 = vmatprep.subr.bf16.mxu0 0
    %184 = vmatpush1.bf16.msra.mxu0 0
    %185 = vmatprep.subr.bf16.mxu0 0
    %186 = vmatpush1.bf16.msra.mxu0 0
    %187 = vmatprep.subr.bf16.mxu0 0
    %188 = vmatpush1.bf16.msra.mxu0 0
    %189 = vmatprep.subr.bf16.mxu0 0
    %190 = vmatpush1.bf16.msra.mxu0 0
    %191 = vmatprep.subr.bf16.mxu0 0
    %192 = vmatpush1.bf16.msra.mxu0 0
    %193 = vmatprep.subr.bf16.mxu0 0
    %194 = vmatpush1.bf16.msra.mxu0 0
    %195 = vmatprep.subr.bf16.mxu0 0
    %196 = vmatpush1.bf16.msra.mxu0 0
    %197 = vmatprep.subr.bf16.mxu0 0
    %198 = vmatpush1.bf16.msra.mxu0 0
    %199 = vmatprep.subr.bf16.mxu0 0
    %200 = vmatpush1.bf16.msra.mxu0 0
    %201 = vmatprep.mubr.bf16.mxu0 0
    %202 = vmatmul.mubr.bf16.gmra.mrb[0].mxu0 %v167
    %v203 = vpop.f32.mrb[0].mxu0
    %v204 = vadd.f32 0.0, %v203
    %v205 = vpop.f32.mrb[0].mxu0
    %v206 = vadd.f32 0.0, %v205
    %v207 = vpop.f32.mrb[0].mxu0
    %v208 = vadd.f32 0.0, %v207
    %v209 = vpop.f32.mrb[0].mxu0
    %v210 = vadd.f32 0.0, %v209
    %211 = vdwg.mxu0
    %v212 = vpack.c.bf16 %v138, %v134
    %v213 = vpack.c.bf16 %v140, %v136
    %v214 = vld [vmem:[#allocation4] sm:$0xff]
    %v215 = vld [vmem:[#allocation4 + $0x8] sm:$0xff]
    %v216 = vld [vmem:[#allocation4 + $0x10] sm:$0xff]
    %v217 = vld [vmem:[#allocation4 + $0x18] sm:$0xff]
    %v218 = vld [vmem:[#allocation4 + $0x20] sm:$0xff]
    %v219 = vld [vmem:[#allocation4 + $0x28] sm:$0xff]
    %v220 = vld [vmem:[#allocation4 + $0x30] sm:$0xff]
    %v221 = vld [vmem:[#allocation4 + $0x38] sm:$0xff]
    %v222 = vld [vmem:[#allocation4 + $0x40] sm:$0xff]
    %v223 = vld [vmem:[#allocation4 + $0x48] sm:$0xff]
    %v224 = vld [vmem:[#allocation4 + $0x50] sm:$0xff]
    %v225 = vld [vmem:[#allocation4 + $0x58] sm:$0xff]
    %v226 = vld [vmem:[#allocation4 + $0x60] sm:$0xff]
    %v227 = vld [vmem:[#allocation4 + $0x68] sm:$0xff]
    %v228 = vld [vmem:[#allocation4 + $0x70] sm:$0xff]
    %v229 = vld [vmem:[#allocation4 + $0x78] sm:$0xff]
    %v230 = vld [vmem:[#allocation4 + $0x80] sm:$0xff]
    %v231 = vld [vmem:[#allocation4 + $0x88] sm:$0xff]
    %v232 = vld [vmem:[#allocation4 + $0x90] sm:$0xff]
    %v233 = vld [vmem:[#allocation4 + $0x98] sm:$0xff]
    %v234 = vld [vmem:[#allocation4 + $0xa0] sm:$0xff]
    %v235 = vld [vmem:[#allocation4 + $0xa8] sm:$0xff]
    %v236 = vld [vmem:[#allocation4 + $0xb0] sm:$0xff]
    %v237 = vld [vmem:[#allocation4 + $0xb8] sm:$0xff]
    %v238 = vld [vmem:[#allocation4 + $0xc0] sm:$0xff]
    %v239 = vld [vmem:[#allocation4 + $0xc8] sm:$0xff]
    %v240 = vld [vmem:[#allocation4 + $0xd0] sm:$0xff]
    %v241 = vld [vmem:[#allocation4 + $0xd8] sm:$0xff]
    %v242 = vld [vmem:[#allocation4 + $0xe0] sm:$0xff]
    %v243 = vld [vmem:[#allocation4 + $0xe8] sm:$0xff]
    %v244 = vld [vmem:[#allocation4 + $0xf0] sm:$0xff]
    %v245 = vld [vmem:[#allocation4 + $0xf8] sm:$0xff]
    %v246 = vld [vmem:[#allocation4 + $0x100] sm:$0xff]
    %v247 = vld [vmem:[#allocation4 + $0x108] sm:$0xff]
    %v248 = vld [vmem:[#allocation4 + $0x110] sm:$0xff]
    %v249 = vld [vmem:[#allocation4 + $0x118] sm:$0xff]
    %v250 = vld [vmem:[#allocation4 + $0x120] sm:$0xff]
    %v251 = vld [vmem:[#allocation4 + $0x128] sm:$0xff]
    %v252 = vld [vmem:[#allocation4 + $0x130] sm:$0xff]
    %v253 = vld [vmem:[#allocation4 + $0x138] sm:$0xff]
    %v254 = vld [vmem:[#allocation4 + $0x140] sm:$0xff]
    %v255 = vld [vmem:[#allocation4 + $0x148] sm:$0xff]
    %v256 = vld [vmem:[#allocation4 + $0x150] sm:$0xff]
    %v257 = vld [vmem:[#allocation4 + $0x158] sm:$0xff]
    %v258 = vld [vmem:[#allocation4 + $0x160] sm:$0xff]
    %v259 = vld [vmem:[#allocation4 + $0x168] sm:$0xff]
    %v260 = vld [vmem:[#allocation4 + $0x170] sm:$0xff]
    %v261 = vld [vmem:[#allocation4 + $0x178] sm:$0xff]
    %v262 = vld [vmem:[#allocation4 + $0x180] sm:$0xff]
    %v263 = vld [vmem:[#allocation4 + $0x188] sm:$0xff]
    %v264 = vld [vmem:[#allocation4 + $0x190] sm:$0xff]
    %v265 = vld [vmem:[#allocation4 + $0x198] sm:$0xff]
    %v266 = vld [vmem:[#allocation4 + $0x1a0] sm:$0xff]
    %v267 = vld [vmem:[#allocation4 + $0x1a8] sm:$0xff]
    %v268 = vld [vmem:[#allocation4 + $0x1b0] sm:$0xff]
    %v269 = vld [vmem:[#allocation4 + $0x1b8] sm:$0xff]
    %v270 = vld [vmem:[#allocation4 + $0x1c0] sm:$0xff]
    %v271 = vld [vmem:[#allocation4 + $0x1c8] sm:$0xff]
    %v272 = vld [vmem:[#allocation4 + $0x1d0] sm:$0xff]
    %v273 = vld [vmem:[#allocation4 + $0x1d8] sm:$0xff]
    %v274 = vld [vmem:[#allocation4 + $0x1e0] sm:$0xff]
    %v275 = vld [vmem:[#allocation4 + $0x1e8] sm:$0xff]
    %v276 = vld [vmem:[#allocation4 + $0x1f0] sm:$0xff]
    %v277 = vld [vmem:[#allocation4 + $0x1f8] sm:$0xff]
    %v342 = vunpack.c.l.b16 %v214
    %v343 = vunpack.c.h.b16 %v214
    %v344 = vunpack.c.l.b16 %v215
    %v345 = vunpack.c.h.b16 %v215
    %v346 = vunpack.c.l.b16 %v216
    %v347 = vunpack.c.h.b16 %v216
    %v348 = vunpack.c.l.b16 %v217
    %v349 = vunpack.c.h.b16 %v217
    %v350 = vunpack.c.l.b16 %v218
    %v351 = vunpack.c.h.b16 %v218
    %v352 = vunpack.c.l.b16 %v219
    %v353 = vunpack.c.h.b16 %v219
    %v354 = vunpack.c.l.b16 %v220
    %v355 = vunpack.c.h.b16 %v220
    %v356 = vunpack.c.l.b16 %v221
    %v357 = vunpack.c.h.b16 %v221
    %v358 = vunpack.c.l.b16 %v222
    %v359 = vunpack.c.h.b16 %v222
    %v360 = vunpack.c.l.b16 %v223
    %v361 = vunpack.c.h.b16 %v223
    %v362 = vunpack.c.l.b16 %v224
    %v363 = vunpack.c.h.b16 %v224
    %v364 = vunpack.c.l.b16 %v225
    %v365 = vunpack.c.h.b16 %v225
    %v366 = vunpack.c.l.b16 %v226
    %v367 = vunpack.c.h.b16 %v226
    %v368 = vunpack.c.l.b16 %v227
    %v369 = vunpack.c.h.b16 %v227
    %v370 = vunpack.c.l.b16 %v228
    %v371 = vunpack.c.h.b16 %v228
    %v372 = vunpack.c.l.b16 %v229
    %v373 = vunpack.c.h.b16 %v229
    %v374 = vunpack.c.l.b16 %v230
    %v375 = vunpack.c.h.b16 %v230
    %v376 = vunpack.c.l.b16 %v231
    %v377 = vunpack.c.h.b16 %v231
    %v378 = vunpack.c.l.b16 %v232
    %v379 = vunpack.c.h.b16 %v232
    %v380 = vunpack.c.l.b16 %v233
    %v381 = vunpack.c.h.b16 %v233
    %v382 = vunpack.c.l.b16 %v234
    %v383 = vunpack.c.h.b16 %v234
    %v384 = vunpack.c.l.b16 %v235
    %v385 = vunpack.c.h.b16 %v235
    %v386 = vunpack.c.l.b16 %v236
    %v387 = vunpack.c.h.b16 %v236
    %v388 = vunpack.c.l.b16 %v237
    %v389 = vunpack.c.h.b16 %v237
    %v390 = vunpack.c.l.b16 %v238
    %v391 = vunpack.c.h.b16 %v238
    %v392 = vunpack.c.l.b16 %v239
    %v393 = vunpack.c.h.b16 %v239
    %v394 = vunpack.c.l.b16 %v240
    %v395 = vunpack.c.h.b16 %v240
    %v396 = vunpack.c.l.b16 %v241
    %v397 = vunpack.c.h.b16 %v241
    %v398 = vunpack.c.l.b16 %v242
    %v399 = vunpack.c.h.b16 %v242
    %v400 = vunpack.c.l.b16 %v243
    %v401 = vunpack.c.h.b16 %v243
    %v402 = vunpack.c.l.b16 %v244
    %v403 = vunpack.c.h.b16 %v244
    %v404 = vunpack.c.l.b16 %v245
    %v405 = vunpack.c.h.b16 %v245
    %v406 = vunpack.c.l.b16 %v246
    %v407 = vunpack.c.h.b16 %v246
    %v408 = vunpack.c.l.b16 %v247
    %v409 = vunpack.c.h.b16 %v247
    %v410 = vunpack.c.l.b16 %v248
    %v411 = vunpack.c.h.b16 %v248
    %v412 = vunpack.c.l.b16 %v249
    %v413 = vunpack.c.h.b16 %v249
    %v414 = vunpack.c.l.b16 %v250
    %v415 = vunpack.c.h.b16 %v250
    %v416 = vunpack.c.l.b16 %v251
    %v417 = vunpack.c.h.b16 %v251
    %v418 = vunpack.c.l.b16 %v252
    %v419 = vunpack.c.h.b16 %v252
    %v420 = vunpack.c.l.b16 %v253
    %v421 = vunpack.c.h.b16 %v253
    %v422 = vunpack.c.l.b16 %v254
    %v423 = vunpack.c.h.b16 %v254
    %v424 = vunpack.c.l.b16 %v255
    %v425 = vunpack.c.h.b16 %v255
    %v426 = vunpack.c.l.b16 %v256
    %v427 = vunpack.c.h.b16 %v256
    %v428 = vunpack.c.l.b16 %v257
    %v429 = vunpack.c.h.b16 %v257
    %v430 = vunpack.c.l.b16 %v258
    %v431 = vunpack.c.h.b16 %v258
    %v432 = vunpack.c.l.b16 %v259
    %v433 = vunpack.c.h.b16 %v259
    %v434 = vunpack.c.l.b16 %v260
    %v435 = vunpack.c.h.b16 %v260
    %v436 = vunpack.c.l.b16 %v261
    %v437 = vunpack.c.h.b16 %v261
    %v438 = vunpack.c.l.b16 %v262
    %v439 = vunpack.c.h.b16 %v262
    %v440 = vunpack.c.l.b16 %v263
    %v441 = vunpack.c.h.b16 %v263
    %v442 = vunpack.c.l.b16 %v264
    %v443 = vunpack.c.h.b16 %v264
    %v444 = vunpack.c.l.b16 %v265
    %v445 = vunpack.c.h.b16 %v265
    %v446 = vunpack.c.l.b16 %v266
    %v447 = vunpack.c.h.b16 %v266
    %v448 = vunpack.c.l.b16 %v267
    %v449 = vunpack.c.h.b16 %v267
    %v450 = vunpack.c.l.b16 %v268
    %v451 = vunpack.c.h.b16 %v268
    %v452 = vunpack.c.l.b16 %v269
    %v453 = vunpack.c.h.b16 %v269
    %v454 = vunpack.c.l.b16 %v270
    %v455 = vunpack.c.h.b16 %v270
    %v456 = vunpack.c.l.b16 %v271
    %v457 = vunpack.c.h.b16 %v271
    %v458 = vunpack.c.l.b16 %v272
    %v459 = vunpack.c.h.b16 %v272
    %v460 = vunpack.c.l.b16 %v273
    %v461 = vunpack.c.h.b16 %v273
    %v462 = vunpack.c.l.b16 %v274
    %v463 = vunpack.c.h.b16 %v274
    %v464 = vunpack.c.l.b16 %v275
    %v465 = vunpack.c.h.b16 %v275
    %v466 = vunpack.c.l.b16 %v276
    %v467 = vunpack.c.h.b16 %v276
    %v468 = vunpack.c.l.b16 %v277
    %v469 = vunpack.c.h.b16 %v277
    %v470 = vpack.c.b16 %v346, %v342
    %v471 = vpack.c.b16 %v347, %v343
    %v472 = vpack.c.b16 %v348, %v344
    %v473 = vpack.c.b16 %v349, %v345
    %v474 = vpack.c.b16 %v354, %v350
    %v475 = vpack.c.b16 %v355, %v351
    %v476 = vpack.c.b16 %v356, %v352
    %v477 = vpack.c.b16 %v357, %v353
    %v478 = vpack.c.b16 %v362, %v358
    %v479 = vpack.c.b16 %v363, %v359
    %v480 = vpack.c.b16 %v364, %v360
    %v481 = vpack.c.b16 %v365, %v361
    %v482 = vpack.c.b16 %v370, %v366
    %v483 = vpack.c.b16 %v371, %v367
    %v484 = vpack.c.b16 %v372, %v368
    %v485 = vpack.c.b16 %v373, %v369
    %v486 = vpack.c.b16 %v378, %v374
    %v487 = vpack.c.b16 %v379, %v375
    %v488 = vpack.c.b16 %v380, %v376
    %v489 = vpack.c.b16 %v381, %v377
    %v490 = vpack.c.b16 %v386, %v382
    %v491 = vpack.c.b16 %v387, %v383
    %v492 = vpack.c.b16 %v388, %v384
    %v493 = vpack.c.b16 %v389, %v385
    %v494 = vpack.c.b16 %v394, %v390
    %v495 = vpack.c.b16 %v395, %v391
    %v496 = vpack.c.b16 %v396, %v392
    %v497 = vpack.c.b16 %v397, %v393
    %v498 = vpack.c.b16 %v402, %v398
    %v499 = vpack.c.b16 %v403, %v399
    %v500 = vpack.c.b16 %v404, %v400
    %v501 = vpack.c.b16 %v405, %v401
    %v502 = vpack.c.b16 %v410, %v406
    %v503 = vpack.c.b16 %v411, %v407
    %v504 = vpack.c.b16 %v412, %v408
    %v505 = vpack.c.b16 %v413, %v409
    %v506 = vpack.c.b16 %v418, %v414
    %v507 = vpack.c.b16 %v419, %v415
    %v508 = vpack.c.b16 %v420, %v416
    %v509 = vpack.c.b16 %v421, %v417
    %v510 = vpack.c.b16 %v426, %v422
    %v511 = vpack.c.b16 %v427, %v423
    %v512 = vpack.c.b16 %v428, %v424
    %v513 = vpack.c.b16 %v429, %v425
    %v514 = vpack.c.b16 %v434, %v430
    %v515 = vpack.c.b16 %v435, %v431
    %v516 = vpack.c.b16 %v436, %v432
    %v517 = vpack.c.b16 %v437, %v433
    %v518 = vpack.c.b16 %v442, %v438
    %v519 = vpack.c.b16 %v443, %v439
    %v520 = vpack.c.b16 %v444, %v440
    %v521 = vpack.c.b16 %v445, %v441
    %v522 = vpack.c.b16 %v450, %v446
    %v523 = vpack.c.b16 %v451, %v447
    %v524 = vpack.c.b16 %v452, %v448
    %v525 = vpack.c.b16 %v453, %v449
    %v526 = vpack.c.b16 %v458, %v454
    %v527 = vpack.c.b16 %v459, %v455
    %v528 = vpack.c.b16 %v460, %v456
    %v529 = vpack.c.b16 %v461, %v457
    %v530 = vpack.c.b16 %v466, %v462
    %v531 = vpack.c.b16 %v467, %v463
    %v532 = vpack.c.b16 %v468, %v464
    %v533 = vpack.c.b16 %v469, %v465
    %598 = vmatprep.subr.bf16.mxu0 %v471
    %599 = vmatpush1.bf16.msra.mxu0 %v470
    %600 = vmatprep.subr.bf16.mxu0 %v475
    %601 = vmatpush1.bf16.msra.mxu0 %v474
    %602 = vmatprep.subr.bf16.mxu0 %v479
    %603 = vmatpush1.bf16.msra.mxu0 %v478
    %604 = vmatprep.subr.bf16.mxu0 %v483
    %605 = vmatpush1.bf16.msra.mxu0 %v482
    %606 = vmatprep.subr.bf16.mxu0 %v487
    %607 = vmatpush1.bf16.msra.mxu0 %v486
    %608 = vmatprep.subr.bf16.mxu0 %v491
    %609 = vmatpush1.bf16.msra.mxu0 %v490
    %610 = vmatprep.subr.bf16.mxu0 %v495
    %611 = vmatpush1.bf16.msra.mxu0 %v494
    %612 = vmatprep.subr.bf16.mxu0 %v499
    %613 = vmatpush1.bf16.msra.mxu0 %v498
    %614 = vmatprep.subr.bf16.mxu0 %v503
    %615 = vmatpush1.bf16.msra.mxu0 %v502
    %616 = vmatprep.subr.bf16.mxu0 %v507
    %617 = vmatpush1.bf16.msra.mxu0 %v506
    %618 = vmatprep.subr.bf16.mxu0 %v511
    %619 = vmatpush1.bf16.msra.mxu0 %v510
    %620 = vmatprep.subr.bf16.mxu0 %v515
    %621 = vmatpush1.bf16.msra.mxu0 %v514
    %622 = vmatprep.subr.bf16.mxu0 %v519
    %623 = vmatpush1.bf16.msra.mxu0 %v518
    %624 = vmatprep.subr.bf16.mxu0 %v523
    %625 = vmatpush1.bf16.msra.mxu0 %v522
    %626 = vmatprep.subr.bf16.mxu0 %v527
    %627 = vmatpush1.bf16.msra.mxu0 %v526
    %628 = vmatprep.subr.bf16.mxu0 %v531
    %629 = vmatpush1.bf16.msra.mxu0 %v530
    %630 = vmatprep.mubr.bf16.mxu0 %v213
    %631 = vmatmul.mubr.bf16.gmra.mrb[0].mxu0 %v212
    %v632 = vpop.f32.mrb[0].mxu0
    %v633 = vadd.f32 0.0, %v632
    %v634 = vpop.f32.mrb[0].mxu0
    %v635 = vadd.f32 0.0, %v634
    %v636 = vpop.f32.mrb[0].mxu0
    %v637 = vadd.f32 0.0, %v636
    %v638 = vpop.f32.mrb[0].mxu0
    %v639 = vadd.f32 0.0, %v638
    %640 = vdwg.mxu0
    %641 = vmatprep.subr.bf16.mxu0 %v473
    %642 = vmatpush1.bf16.msra.mxu0 %v472
    %643 = vmatprep.subr.bf16.mxu0 %v477
    %644 = vmatpush1.bf16.msra.mxu0 %v476
    %645 = vmatprep.subr.bf16.mxu0 %v481
    %646 = vmatpush1.bf16.msra.mxu0 %v480
    %647 = vmatprep.subr.bf16.mxu0 %v485
    %648 = vmatpush1.bf16.msra.mxu0 %v484
    %649 = vmatprep.subr.bf16.mxu0 %v489
    %650 = vmatpush1.bf16.msra.mxu0 %v488
    %651 = vmatprep.subr.bf16.mxu0 %v493
    %652 = vmatpush1.bf16.msra.mxu0 %v492
    %653 = vmatprep.subr.bf16.mxu0 %v497
    %654 = vmatpush1.bf16.msra.mxu0 %v496
    %655 = vmatprep.subr.bf16.mxu0 %v501
    %656 = vmatpush1.bf16.msra.mxu0 %v500
    %657 = vmatprep.subr.bf16.mxu0 %v505
    %658 = vmatpush1.bf16.msra.mxu0 %v504
    %659 = vmatprep.subr.bf16.mxu0 %v509
    %660 = vmatpush1.bf16.msra.mxu0 %v508
    %661 = vmatprep.subr.bf16.mxu0 %v513
    %662 = vmatpush1.bf16.msra.mxu0 %v512
    %663 = vmatprep.subr.bf16.mxu0 %v517
    %664 = vmatpush1.bf16.msra.mxu0 %v516
    %665 = vmatprep.subr.bf16.mxu0 %v521
    %666 = vmatpush1.bf16.msra.mxu0 %v520
    %667 = vmatprep.subr.bf16.mxu0 %v525
    %668 = vmatpush1.bf16.msra.mxu0 %v524
    %669 = vmatprep.subr.bf16.mxu0 %v529
    %670 = vmatpush1.bf16.msra.mxu0 %v528
    %671 = vmatprep.subr.bf16.mxu0 %v533
    %672 = vmatpush1.bf16.msra.mxu0 %v532
    %673 = vmatprep.mubr.bf16.mxu0 %v213
    %674 = vmatmul.mubr.bf16.gmra.mrb[0].mxu0 %v212
    %v675 = vpop.f32.mrb[0].mxu0
    %v676 = vadd.f32 0.0, %v675
    %v677 = vpop.f32.mrb[0].mxu0
    %v678 = vadd.f32 0.0, %v677
    %v679 = vpop.f32.mrb[0].mxu0
    %v680 = vadd.f32 0.0, %v679
    %v681 = vpop.f32.mrb[0].mxu0
    %v682 = vadd.f32 0.0, %v681
    %683 = vdwg.mxu0
    %v684 = vpack.c.bf16 %v208, %v204
    %v685 = vpack.c.bf16 %v210, %v206
    %686 = vmatprep.subr.bf16.mxu0 %v471
    %687 = vmatpush1.bf16.msra.mxu0 %v470
    %688 = vmatprep.subr.bf16.mxu0 %v475
    %689 = vmatpush1.bf16.msra.mxu0 %v474
    %690 = vmatprep.subr.bf16.mxu0 %v479
    %691 = vmatpush1.bf16.msra.mxu0 %v478
    %692 = vmatprep.subr.bf16.mxu0 %v483
    %693 = vmatpush1.bf16.msra.mxu0 %v482
    %694 = vmatprep.subr.bf16.mxu0 %v487
    %695 = vmatpush1.bf16.msra.mxu0 %v486
    %696 = vmatprep.subr.bf16.mxu0 %v491
    %697 = vmatpush1.bf16.msra.mxu0 %v490
    %698 = vmatprep.subr.bf16.mxu0 %v495
    %699 = vmatpush1.bf16.msra.mxu0 %v494
    %700 = vmatprep.subr.bf16.mxu0 %v499
    %701 = vmatpush1.bf16.msra.mxu0 %v498
    %702 = vmatprep.subr.bf16.mxu0 %v503
    %703 = vmatpush1.bf16.msra.mxu0 %v502
    %704 = vmatprep.subr.bf16.mxu0 %v507
    %705 = vmatpush1.bf16.msra.mxu0 %v506
    %706 = vmatprep.subr.bf16.mxu0 %v511
    %707 = vmatpush1.bf16.msra.mxu0 %v510
    %708 = vmatprep.subr.bf16.mxu0 %v515
    %709 = vmatpush1.bf16.msra.mxu0 %v514
    %710 = vmatprep.subr.bf16.mxu0 %v519
    %711 = vmatpush1.bf16.msra.mxu0 %v518
    %712 = vmatprep.subr.bf16.mxu0 %v523
    %713 = vmatpush1.bf16.msra.mxu0 %v522
    %714 = vmatprep.subr.bf16.mxu0 %v527
    %715 = vmatpush1.bf16.msra.mxu0 %v526
    %716 = vmatprep.subr.bf16.mxu0 %v531
    %717 = vmatpush1.bf16.msra.mxu0 %v530
    %718 = vmatprep.mubr.bf16.mxu0 %v685
    %719 = vmatmul.mubr.bf16.gmra.mrb[0].mxu0 %v684
    %v720 = vpop.f32.mrb[0].mxu0
    %v721 = vadd.f32 0.0, %v720
    %v722 = vpop.f32.mrb[0].mxu0
    %v723 = vadd.f32 0.0, %v722
    %v724 = vpop.f32.mrb[0].mxu0
    %v725 = vadd.f32 0.0, %v724
    %v726 = vpop.f32.mrb[0].mxu0
    %v727 = vadd.f32 0.0, %v726
    %728 = vdwg.mxu0
    %729 = vmatprep.subr.bf16.mxu0 %v473
    %730 = vmatpush1.bf16.msra.mxu0 %v472
    %731 = vmatprep.subr.bf16.mxu0 %v477
    %732 = vmatpush1.bf16.msra.mxu0 %v476
    %733 = vmatprep.subr.bf16.mxu0 %v481
    %734 = vmatpush1.bf16.msra.mxu0 %v480
    %735 = vmatprep.subr.bf16.mxu0 %v485
    %736 = vmatpush1.bf16.msra.mxu0 %v484
    %737 = vmatprep.subr.bf16.mxu0 %v489
    %738 = vmatpush1.bf16.msra.mxu0 %v488
    %739 = vmatprep.subr.bf16.mxu0 %v493
    %740 = vmatpush1.bf16.msra.mxu0 %v492
    %741 = vmatprep.subr.bf16.mxu0 %v497
    %742 = vmatpush1.bf16.msra.mxu0 %v496
    %743 = vmatprep.subr.bf16.mxu0 %v501
    %744 = vmatpush1.bf16.msra.mxu0 %v500
    %745 = vmatprep.subr.bf16.mxu0 %v505
    %746 = vmatpush1.bf16.msra.mxu0 %v504
    %747 = vmatprep.subr.bf16.mxu0 %v509
    %748 = vmatpush1.bf16.msra.mxu0 %v508
    %749 = vmatprep.subr.bf16.mxu0 %v513
    %750 = vmatpush1.bf16.msra.mxu0 %v512
    %751 = vmatprep.subr.bf16.mxu0 %v517
    %752 = vmatpush1.bf16.msra.mxu0 %v516
    %753 = vmatprep.subr.bf16.mxu0 %v521
    %754 = vmatpush1.bf16.msra.mxu0 %v520
    %755 = vmatprep.subr.bf16.mxu0 %v525
    %756 = vmatpush1.bf16.msra.mxu0 %v524
    %757 = vmatprep.subr.bf16.mxu0 %v529
    %758 = vmatpush1.bf16.msra.mxu0 %v528
    %759 = vmatprep.subr.bf16.mxu0 %v533
    %760 = vmatpush1.bf16.msra.mxu0 %v532
    %761 = vmatprep.mubr.bf16.mxu0 %v685
    %762 = vmatmul.mubr.bf16.gmra.mrb[0].mxu0 %v684
    %v763 = vpop.f32.mrb[0].mxu0
    %v764 = vadd.f32 0.0, %v763
    %v765 = vpop.f32.mrb[0].mxu0
    %v766 = vadd.f32 0.0, %v765
    %v767 = vpop.f32.mrb[0].mxu0
    %v768 = vadd.f32 0.0, %v767
    %v769 = vpop.f32.mrb[0].mxu0
    %v770 = vadd.f32 0.0, %v769
    %771 = vdwg.mxu0
    %v772 = vmul.f32 %v633, %v721
    %v773 = vmul.f32 %v635, %v723
    %v774 = vmul.f32 %v676, %v764
    %v775 = vmul.f32 %v678, %v766
    %v776 = vmul.f32 %v637, %v725
    %v777 = vmul.f32 %v639, %v727
    %v778 = vmul.f32 %v680, %v768
    %v779 = vmul.f32 %v682, %v770
    %v780 = vpack.c.bf16 %v776, %v772
    %v781 = vpack.c.bf16 %v777, %v773
    %v782 = vpack.c.bf16 %v778, %v774
    %v783 = vpack.c.bf16 %v779, %v775
    %v784 = vld [vmem:[#allocation6] sm:$0xff]
    %v785 = vld [vmem:[#allocation6 + $0x8] sm:$0xff]
    %v786 = vld [vmem:[#allocation6 + $0x10] sm:$0xff]
    %v787 = vld [vmem:[#allocation6 + $0x18] sm:$0xff]
    %v788 = vld [vmem:[#allocation6 + $0x20] sm:$0xff]
    %v789 = vld [vmem:[#allocation6 + $0x28] sm:$0xff]
    %v790 = vld [vmem:[#allocation6 + $0x30] sm:$0xff]
    %v791 = vld [vmem:[#allocation6 + $0x38] sm:$0xff]
    %v792 = vld [vmem:[#allocation6 + $0x40] sm:$0xff]
    %v793 = vld [vmem:[#allocation6 + $0x48] sm:$0xff]
    %v794 = vld [vmem:[#allocation6 + $0x50] sm:$0xff]
    %v795 = vld [vmem:[#allocation6 + $0x58] sm:$0xff]
    %v796 = vld [vmem:[#allocation6 + $0x60] sm:$0xff]
    %v797 = vld [vmem:[#allocation6 + $0x68] sm:$0xff]
    %v798 = vld [vmem:[#allocation6 + $0x70] sm:$0xff]
    %v799 = vld [vmem:[#allocation6 + $0x78] sm:$0xff]
    %v800 = vld [vmem:[#allocation6 + $0x80] sm:$0xff]
    %v801 = vld [vmem:[#allocation6 + $0x88] sm:$0xff]
    %v802 = vld [vmem:[#allocation6 + $0x90] sm:$0xff]
    %v803 = vld [vmem:[#allocation6 + $0x98] sm:$0xff]
    %v804 = vld [vmem:[#allocation6 + $0xa0] sm:$0xff]
    %v805 = vld [vmem:[#allocation6 + $0xa8] sm:$0xff]
    %v806 = vld [vmem:[#allocation6 + $0xb0] sm:$0xff]
    %v807 = vld [vmem:[#allocation6 + $0xb8] sm:$0xff]
    %v808 = vld [vmem:[#allocation6 + $0xc0] sm:$0xff]
    %v809 = vld [vmem:[#allocation6 + $0xc8] sm:$0xff]
    %v810 = vld [vmem:[#allocation6 + $0xd0] sm:$0xff]
    %v811 = vld [vmem:[#allocation6 + $0xd8] sm:$0xff]
    %v812 = vld [vmem:[#allocation6 + $0xe0] sm:$0xff]
    %v813 = vld [vmem:[#allocation6 + $0xe8] sm:$0xff]
    %v814 = vld [vmem:[#allocation6 + $0xf0] sm:$0xff]
    %v815 = vld [vmem:[#allocation6 + $0xf8] sm:$0xff]
    %v816 = vld [vmem:[#allocation6 + $0x100] sm:$0xff]
    %v817 = vld [vmem:[#allocation6 + $0x108] sm:$0xff]
    %v818 = vld [vmem:[#allocation6 + $0x110] sm:$0xff]
    %v819 = vld [vmem:[#allocation6 + $0x118] sm:$0xff]
    %v820 = vld [vmem:[#allocation6 + $0x120] sm:$0xff]
    %v821 = vld [vmem:[#allocation6 + $0x128] sm:$0xff]
    %v822 = vld [vmem:[#allocation6 + $0x130] sm:$0xff]
    %v823 = vld [vmem:[#allocation6 + $0x138] sm:$0xff]
    %v824 = vld [vmem:[#allocation6 + $0x140] sm:$0xff]
    %v825 = vld [vmem:[#allocation6 + $0x148] sm:$0xff]
    %v826 = vld [vmem:[#allocation6 + $0x150] sm:$0xff]
    %v827 = vld [vmem:[#allocation6 + $0x158] sm:$0xff]
    %v828 = vld [vmem:[#allocation6 + $0x160] sm:$0xff]
    %v829 = vld [vmem:[#allocation6 + $0x168] sm:$0xff]
    %v830 = vld [vmem:[#allocation6 + $0x170] sm:$0xff]
    %v831 = vld [vmem:[#allocation6 + $0x178] sm:$0xff]
    %v832 = vld [vmem:[#allocation6 + $0x180] sm:$0xff]
    %v833 = vld [vmem:[#allocation6 + $0x188] sm:$0xff]
    %v834 = vld [vmem:[#allocation6 + $0x190] sm:$0xff]
    %v835 = vld [vmem:[#allocation6 + $0x198] sm:$0xff]
    %v836 = vld [vmem:[#allocation6 + $0x1a0] sm:$0xff]
    %v837 = vld [vmem:[#allocation6 + $0x1a8] sm:$0xff]
    %v838 = vld [vmem:[#allocation6 + $0x1b0] sm:$0xff]
    %v839 = vld [vmem:[#allocation6 + $0x1b8] sm:$0xff]
    %v840 = vld [vmem:[#allocation6 + $0x1c0] sm:$0xff]
    %v841 = vld [vmem:[#allocation6 + $0x1c8] sm:$0xff]
    %v842 = vld [vmem:[#allocation6 + $0x1d0] sm:$0xff]
    %v843 = vld [vmem:[#allocation6 + $0x1d8] sm:$0xff]
    %v844 = vld [vmem:[#allocation6 + $0x1e0] sm:$0xff]
    %v845 = vld [vmem:[#allocation6 + $0x1e8] sm:$0xff]
    %v846 = vld [vmem:[#allocation6 + $0x1f0] sm:$0xff]
    %v847 = vld [vmem:[#allocation6 + $0x1f8] sm:$0xff]
    %v912 = vunpack.c.l.b16 %v784
    %v913 = vunpack.c.h.b16 %v784
    %v914 = vunpack.c.l.b16 %v785
    %v915 = vunpack.c.h.b16 %v785
    %v916 = vunpack.c.l.b16 %v786
    %v917 = vunpack.c.h.b16 %v786
    %v918 = vunpack.c.l.b16 %v787
    %v919 = vunpack.c.h.b16 %v787
    %v920 = vunpack.c.l.b16 %v788
    %v921 = vunpack.c.h.b16 %v788
    %v922 = vunpack.c.l.b16 %v789
    %v923 = vunpack.c.h.b16 %v789
    %v924 = vunpack.c.l.b16 %v790
    %v925 = vunpack.c.h.b16 %v790
    %v926 = vunpack.c.l.b16 %v791
    %v927 = vunpack.c.h.b16 %v791
    %v928 = vunpack.c.l.b16 %v792
    %v929 = vunpack.c.h.b16 %v792
    %v930 = vunpack.c.l.b16 %v793
    %v931 = vunpack.c.h.b16 %v793
    %v932 = vunpack.c.l.b16 %v794
    %v933 = vunpack.c.h.b16 %v794
    %v934 = vunpack.c.l.b16 %v795
    %v935 = vunpack.c.h.b16 %v795
    %v936 = vunpack.c.l.b16 %v796
    %v937 = vunpack.c.h.b16 %v796
    %v938 = vunpack.c.l.b16 %v797
    %v939 = vunpack.c.h.b16 %v797
    %v940 = vunpack.c.l.b16 %v798
    %v941 = vunpack.c.h.b16 %v798
    %v942 = vunpack.c.l.b16 %v799
    %v943 = vunpack.c.h.b16 %v799
    %v944 = vunpack.c.l.b16 %v800
    %v945 = vunpack.c.h.b16 %v800
    %v946 = vunpack.c.l.b16 %v801
    %v947 = vunpack.c.h.b16 %v801
    %v948 = vunpack.c.l.b16 %v802
    %v949 = vunpack.c.h.b16 %v802
    %v950 = vunpack.c.l.b16 %v803
    %v951 = vunpack.c.h.b16 %v803
    %v952 = vunpack.c.l.b16 %v804
    %v953 = vunpack.c.h.b16 %v804
    %v954 = vunpack.c.l.b16 %v805
    %v955 = vunpack.c.h.b16 %v805
    %v956 = vunpack.c.l.b16 %v806
    %v957 = vunpack.c.h.b16 %v806
    %v958 = vunpack.c.l.b16 %v807
    %v959 = vunpack.c.h.b16 %v807
    %v960 = vunpack.c.l.b16 %v808
    %v961 = vunpack.c.h.b16 %v808
    %v962 = vunpack.c.l.b16 %v809
    %v963 = vunpack.c.h.b16 %v809
    %v964 = vunpack.c.l.b16 %v810
    %v965 = vunpack.c.h.b16 %v810
    %v966 = vunpack.c.l.b16 %v811
    %v967 = vunpack.c.h.b16 %v811
    %v968 = vunpack.c.l.b16 %v812
    %v969 = vunpack.c.h.b16 %v812
    %v970 = vunpack.c.l.b16 %v813
    %v971 = vunpack.c.h.b16 %v813
    %v972 = vunpack.c.l.b16 %v814
    %v973 = vunpack.c.h.b16 %v814
    %v974 = vunpack.c.l.b16 %v815
    %v975 = vunpack.c.h.b16 %v815
    %v976 = vunpack.c.l.b16 %v816
    %v977 = vunpack.c.h.b16 %v816
    %v978 = vunpack.c.l.b16 %v817
    %v979 = vunpack.c.h.b16 %v817
    %v980 = vunpack.c.l.b16 %v818
    %v981 = vunpack.c.h.b16 %v818
    %v982 = vunpack.c.l.b16 %v819
    %v983 = vunpack.c.h.b16 %v819
    %v984 = vunpack.c.l.b16 %v820
    %v985 = vunpack.c.h.b16 %v820
    %v986 = vunpack.c.l.b16 %v821
    %v987 = vunpack.c.h.b16 %v821
    %v988 = vunpack.c.l.b16 %v822
    %v989 = vunpack.c.h.b16 %v822
    %v990 = vunpack.c.l.b16 %v823
    %v991 = vunpack.c.h.b16 %v823
    %v992 = vunpack.c.l.b16 %v824
    %v993 = vunpack.c.h.b16 %v824
    %v994 = vunpack.c.l.b16 %v825
    %v995 = vunpack.c.h.b16 %v825
    %v996 = vunpack.c.l.b16 %v826
    %v997 = vunpack.c.h.b16 %v826
    %v998 = vunpack.c.l.b16 %v827
    %v999 = vunpack.c.h.b16 %v827
    %v1000 = vunpack.c.l.b16 %v828
    %v1001 = vunpack.c.h.b16 %v828
    %v1002 = vunpack.c.l.b16 %v829
    %v1003 = vunpack.c.h.b16 %v829
    %v1004 = vunpack.c.l.b16 %v830
    %v1005 = vunpack.c.h.b16 %v830
    %v1006 = vunpack.c.l.b16 %v831
    %v1007 = vunpack.c.h.b16 %v831
    %v1008 = vunpack.c.l.b16 %v832
    %v1009 = vunpack.c.h.b16 %v832
    %v1010 = vunpack.c.l.b16 %v833
    %v1011 = vunpack.c.h.b16 %v833
    %v1012 = vunpack.c.l.b16 %v834
    %v1013 = vunpack.c.h.b16 %v834
    %v1014 = vunpack.c.l.b16 %v835
    %v1015 = vunpack.c.h.b16 %v835
    %v1016 = vunpack.c.l.b16 %v836
    %v1017 = vunpack.c.h.b16 %v836
    %v1018 = vunpack.c.l.b16 %v837
    %v1019 = vunpack.c.h.b16 %v837
    %v1020 = vunpack.c.l.b16 %v838
    %v1021 = vunpack.c.h.b16 %v838
    %v1022 = vunpack.c.l.b16 %v839
    %v1023 = vunpack.c.h.b16 %v839
    %v1024 = vunpack.c.l.b16 %v840
    %v1025 = vunpack.c.h.b16 %v840
    %v1026 = vunpack.c.l.b16 %v841
    %v1027 = vunpack.c.h.b16 %v841
    %v1028 = vunpack.c.l.b16 %v842
    %v1029 = vunpack.c.h.b16 %v842
    %v1030 = vunpack.c.l.b16 %v843
    %v1031 = vunpack.c.h.b16 %v843
    %v1032 = vunpack.c.l.b16 %v844
    %v1033 = vunpack.c.h.b16 %v844
    %v1034 = vunpack.c.l.b16 %v845
    %v1035 = vunpack.c.h.b16 %v845
    %v1036 = vunpack.c.l.b16 %v846
    %v1037 = vunpack.c.h.b16 %v846
    %v1038 = vunpack.c.l.b16 %v847
    %v1039 = vunpack.c.h.b16 %v847
    %v1040 = vpack.c.b16 %v914, %v912
    %v1041 = vpack.c.b16 %v915, %v913
    %v1042 = vpack.c.b16 %v918, %v916
    %v1043 = vpack.c.b16 %v919, %v917
    %v1044 = vpack.c.b16 %v922, %v920
    %v1045 = vpack.c.b16 %v923, %v921
    %v1046 = vpack.c.b16 %v926, %v924
    %v1047 = vpack.c.b16 %v927, %v925
    %v1048 = vpack.c.b16 %v930, %v928
    %v1049 = vpack.c.b16 %v931, %v929
    %v1050 = vpack.c.b16 %v934, %v932
    %v1051 = vpack.c.b16 %v935, %v933
    %v1052 = vpack.c.b16 %v938, %v936
    %v1053 = vpack.c.b16 %v939, %v937
    %v1054 = vpack.c.b16 %v942, %v940
    %v1055 = vpack.c.b16 %v943, %v941
    %v1056 = vpack.c.b16 %v946, %v944
    %v1057 = vpack.c.b16 %v947, %v945
    %v1058 = vpack.c.b16 %v950, %v948
    %v1059 = vpack.c.b16 %v951, %v949
    %v1060 = vpack.c.b16 %v954, %v952
    %v1061 = vpack.c.b16 %v955, %v953
    %v1062 = vpack.c.b16 %v958, %v956
    %v1063 = vpack.c.b16 %v959, %v957
    %v1064 = vpack.c.b16 %v962, %v960
    %v1065 = vpack.c.b16 %v963, %v961
    %v1066 = vpack.c.b16 %v966, %v964
    %v1067 = vpack.c.b16 %v967, %v965
    %v1068 = vpack.c.b16 %v970, %v968
    %v1069 = vpack.c.b16 %v971, %v969
    %v1070 = vpack.c.b16 %v974, %v972
    %v1071 = vpack.c.b16 %v975, %v973
    %v1072 = vpack.c.b16 %v978, %v976
    %v1073 = vpack.c.b16 %v979, %v977
    %v1074 = vpack.c.b16 %v982, %v980
    %v1075 = vpack.c.b16 %v983, %v981
    %v1076 = vpack.c.b16 %v986, %v984
    %v1077 = vpack.c.b16 %v987, %v985
    %v1078 = vpack.c.b16 %v990, %v988
    %v1079 = vpack.c.b16 %v991, %v989
    %v1080 = vpack.c.b16 %v994, %v992
    %v1081 = vpack.c.b16 %v995, %v993
    %v1082 = vpack.c.b16 %v998, %v996
    %v1083 = vpack.c.b16 %v999, %v997
    %v1084 = vpack.c.b16 %v1002, %v1000
    %v1085 = vpack.c.b16 %v1003, %v1001
    %v1086 = vpack.c.b16 %v1006, %v1004
    %v1087 = vpack.c.b16 %v1007, %v1005
    %v1088 = vpack.c.b16 %v1010, %v1008
    %v1089 = vpack.c.b16 %v1011, %v1009
    %v1090 = vpack.c.b16 %v1014, %v1012
    %v1091 = vpack.c.b16 %v1015, %v1013
    %v1092 = vpack.c.b16 %v1018, %v1016
    %v1093 = vpack.c.b16 %v1019, %v1017
    %v1094 = vpack.c.b16 %v1022, %v1020
    %v1095 = vpack.c.b16 %v1023, %v1021
    %v1096 = vpack.c.b16 %v1026, %v1024
    %v1097 = vpack.c.b16 %v1027, %v1025
    %v1098 = vpack.c.b16 %v1030, %v1028
    %v1099 = vpack.c.b16 %v1031, %v1029
    %v1100 = vpack.c.b16 %v1034, %v1032
    %v1101 = vpack.c.b16 %v1035, %v1033
    %v1102 = vpack.c.b16 %v1038, %v1036
    %v1103 = vpack.c.b16 %v1039, %v1037
    %1168 = vmatprep.subr.bf16.mxu0 %v1041
    %1169 = vmatpush1.bf16.msra.mxu0 %v1040
    %1170 = vmatprep.subr.bf16.mxu0 %v1043
    %1171 = vmatpush1.bf16.msra.mxu0 %v1042
    %1172 = vmatprep.subr.bf16.mxu0 %v1045
    %1173 = vmatpush1.bf16.msra.mxu0 %v1044
    %1174 = vmatprep.subr.bf16.mxu0 %v1047
    %1175 = vmatpush1.bf16.msra.mxu0 %v1046
    %1176 = vmatprep.subr.bf16.mxu0 %v1049
    %1177 = vmatpush1.bf16.msra.mxu0 %v1048
    %1178 = vmatprep.subr.bf16.mxu0 %v1051
    %1179 = vmatpush1.bf16.msra.mxu0 %v1050
    %1180 = vmatprep.subr.bf16.mxu0 %v1053
    %1181 = vmatpush1.bf16.msra.mxu0 %v1052
    %1182 = vmatprep.subr.bf16.mxu0 %v1055
    %1183 = vmatpush1.bf16.msra.mxu0 %v1054
    %1184 = vmatprep.subr.bf16.mxu0 %v1057
    %1185 = vmatpush1.bf16.msra.mxu0 %v1056
    %1186 = vmatprep.subr.bf16.mxu0 %v1059
    %1187 = vmatpush1.bf16.msra.mxu0 %v1058
    %1188 = vmatprep.subr.bf16.mxu0 %v1061
    %1189 = vmatpush1.bf16.msra.mxu0 %v1060
    %1190 = vmatprep.subr.bf16.mxu0 %v1063
    %1191 = vmatpush1.bf16.msra.mxu0 %v1062
    %1192 = vmatprep.subr.bf16.mxu0 %v1065
    %1193 = vmatpush1.bf16.msra.mxu0 %v1064
    %1194 = vmatprep.subr.bf16.mxu0 %v1067
    %1195 = vmatpush1.bf16.msra.mxu0 %v1066
    %1196 = vmatprep.subr.bf16.mxu0 %v1069
    %1197 = vmatpush1.bf16.msra.mxu0 %v1068
    %1198 = vmatprep.subr.bf16.mxu0 %v1071
    %1199 = vmatpush1.bf16.msra.mxu0 %v1070
    %1200 = vmatprep.mubr.bf16.mxu0 %v781
    %1201 = vmatmul.mubr.bf16.gmra.mrb[0].mxu0 %v780
    %v1202 = vpop.f32.mrb[0].mxu0
    %v1203 = vadd.f32 0.0, %v1202
    %v1204 = vpop.f32.mrb[0].mxu0
    %v1205 = vadd.f32 0.0, %v1204
    %v1206 = vpop.f32.mrb[0].mxu0
    %v1207 = vadd.f32 0.0, %v1206
    %v1208 = vpop.f32.mrb[0].mxu0
    %v1209 = vadd.f32 0.0, %v1208
    %1210 = vdwg.mxu0
    %1211 = vmatprep.subr.bf16.mxu0 %v1073
    %1212 = vmatpush1.bf16.msra.mxu0 %v1072
    %1213 = vmatprep.subr.bf16.mxu0 %v1075
    %1214 = vmatpush1.bf16.msra.mxu0 %v1074
    %1215 = vmatprep.subr.bf16.mxu0 %v1077
    %1216 = vmatpush1.bf16.msra.mxu0 %v1076
    %1217 = vmatprep.subr.bf16.mxu0 %v1079
    %1218 = vmatpush1.bf16.msra.mxu0 %v1078
    %1219 = vmatprep.subr.bf16.mxu0 %v1081
    %1220 = vmatpush1.bf16.msra.mxu0 %v1080
    %1221 = vmatprep.subr.bf16.mxu0 %v1083
    %1222 = vmatpush1.bf16.msra.mxu0 %v1082
    %1223 = vmatprep.subr.bf16.mxu0 %v1085
    %1224 = vmatpush1.bf16.msra.mxu0 %v1084
    %1225 = vmatprep.subr.bf16.mxu0 %v1087
    %1226 = vmatpush1.bf16.msra.mxu0 %v1086
    %1227 = vmatprep.subr.bf16.mxu0 %v1089
    %1228 = vmatpush1.bf16.msra.mxu0 %v1088
    %1229 = vmatprep.subr.bf16.mxu0 %v1091
    %1230 = vmatpush1.bf16.msra.mxu0 %v1090
    %1231 = vmatprep.subr.bf16.mxu0 %v1093
    %1232 = vmatpush1.bf16.msra.mxu0 %v1092
    %1233 = vmatprep.subr.bf16.mxu0 %v1095
    %1234 = vmatpush1.bf16.msra.mxu0 %v1094
    %1235 = vmatprep.subr.bf16.mxu0 %v1097
    %1236 = vmatpush1.bf16.msra.mxu0 %v1096
    %1237 = vmatprep.subr.bf16.mxu0 %v1099
    %1238 = vmatpush1.bf16.msra.mxu0 %v1098
    %1239 = vmatprep.subr.bf16.mxu0 %v1101
    %1240 = vmatpush1.bf16.msra.mxu0 %v1100
    %1241 = vmatprep.subr.bf16.mxu0 %v1103
    %1242 = vmatpush1.bf16.msra.mxu0 %v1102
    %1243 = vmatprep.mubr.bf16.mxu0 %v783
    %1244 = vmatmul.mubr.bf16.gmra.mrb[0].mxu0 %v782
    %v1245 = vpop.f32.mrb[0].mxu0
    %v1246 = vadd.f32 %v1203, %v1245
    %v1247 = vpop.f32.mrb[0].mxu0
    %v1248 = vadd.f32 %v1205, %v1247
    %v1249 = vpop.f32.mrb[0].mxu0
    %v1250 = vadd.f32 %v1207, %v1249
    %v1251 = vpop.f32.mrb[0].mxu0
    %v1252 = vadd.f32 %v1209, %v1251
    %1253 = vdwg.mxu0
    %1254 = vst [vmem:[%s6] sm:$0xff] %v1246
    %1255 = vst [vmem:[%s6 + $0x8] sm:$0xff] %v1248
    %1256 = vst [vmem:[%s6 + $0x10] sm:$0xff] %v1250
    %1257 = vst [vmem:[%s6 + $0x18] sm:$0xff] %v1252
    // Predicated region
    $region38: #{_mcb_pallas.1} parent=1 // pred_check
      _
    $region39: #{_mcb_pallas.1} parent=1 // pred_check_branch
      %1259 = sbr.rel (0) target = $region41
    $region40: #{_mcb_pallas.1} parent=1 // pred_region
      _
    $region41: #{_mcb_pallas.1} parent=1 // pred_fallthru
      _
    // Predicated region
    $region42: #{_mcb_pallas.1} parent=1 // pred_check
      _
    $region43: #{_mcb_pallas.1} parent=1 // pred_check_branch
      %1261 = sbr.rel (0) target = $region45
    $region44: #{_mcb_pallas.1} parent=1 // pred_region
      _
    $region45: #{_mcb_pallas.1} parent=1 // pred_fallthru
      _
    %1262 = vsyncpa [#allocation3], 1
    %1263 = vsyncpa [#allocation5], 1

</llo_original>
